<compile_context>
chip_gen: v7x
topology: tpu7x:2x2x1
jax: 0.10.0
libtpu: 0.0.40
codegen_flags: <defaults>
</compile_context>

<pallas_src>
import functools

import jax
import jax.numpy as jnp
from jax import lax
from jax.experimental import pallas as pl
from jax.experimental.pallas import tpu as pltpu


def gru_kernel(x_ref, w_i3_ref, w_h3_ref, b_i3_ref, b_hn_ref,
               out_ref, hN_ref, xp_ref, *, matmul_dtype):
    T, Bp, Hp = out_ref.shape

    # ---- Hoisted input projection: one big MXU matmul for the whole sequence ----
    # xp[t*Bp:(t+1)*Bp, :] = x_t @ [W_ir | W_iz | W_in] + [b_r | b_z | b_in]
    xp_ref[...] = (
        jnp.dot(x_ref[...].astype(matmul_dtype),
                w_i3_ref[...].astype(matmul_dtype),
                preferred_element_type=jnp.float32)
        + b_i3_ref[...])

    w_h3 = w_h3_ref[...].astype(matmul_dtype)                 # (Hp, 3Hp), resident
    b_hn = jnp.broadcast_to(b_hn_ref[...], (Bp, Hp))          # hoisted broadcast

    def step(t, h):
        xg = xp_ref[pl.ds(t * Bp, Bp), :]                     # (Bp, 3Hp), biases folded
        hg = jnp.dot(h.astype(matmul_dtype), w_h3,            # single fused hidden matmul
                     preferred_element_type=jnp.float32)      # (Bp, 3Hp)
        # PyTorch GRU gate equations (gate order r, z, n); elementwise math in f32.
        r = jax.nn.sigmoid(xg[:, :Hp] + hg[:, :Hp])
        z = jax.nn.sigmoid(xg[:, Hp:2 * Hp] + hg[:, Hp:2 * Hp])
        n = jnp.tanh(xg[:, 2 * Hp:] + r * (hg[:, 2 * Hp:] + b_hn))
        h_new = (1.0 - z) * n + z * h
        out_ref[t] = h_new.astype(out_ref.dtype)              # lane-dense (Bp, Hp) store
        return h_new

    h_final = lax.fori_loop(0, T, step, jnp.zeros((Bp, Hp), jnp.float32),
                            unroll=True)
    hN_ref[...] = h_final.astype(hN_ref.dtype)


def _round_up(n, m):
    return ((n + m - 1) // m) * m


def rnn_encoder_forward(x, params, *, matmul_dtype=jnp.float32):
    """x: (B, T, F) float32.  Returns (gru_out (B, T, H), hidden (B, H))."""
    B, T, F = x.shape
    H = params["w_hr"].shape[1]
    Bp = _round_up(B, 8)        # sublane-pad batch
    Hp = _round_up(H, 128)      # lane-pad hidden -> unmasked vld/vst, full MXU tiles

    def pad2(a, rows, cols):
        return jnp.pad(a, ((0, rows - a.shape[0]), (0, cols - a.shape[1])))

    # Fused, zero-padded weights / biases.  Gate order: r | z | n.
    w_i3 = jnp.concatenate([pad2(params["w_ir"], F, Hp),
                            pad2(params["w_iz"], F, Hp),
                            pad2(params["w_in"], F, Hp)], axis=1)      # (F, 3Hp)
    w_h3 = jnp.concatenate([pad2(params["w_hr"], Hp, Hp),
                            pad2(params["w_hz"], Hp, Hp),
                            pad2(params["w_hn"], Hp, Hp)], axis=1)     # (Hp, 3Hp)
    b_i3 = jnp.concatenate([pad2(params["b_r"], 1, Hp),
                            pad2(params["b_z"], 1, Hp),
                            pad2(params["b_in"], 1, Hp)], axis=1)      # (1, 3Hp)
    b_hn = pad2(params["b_hn"], 1, Hp)                                 # (1, Hp)
    # Zero padding keeps padded hidden lanes exactly zero through the recurrence.

    # Time-major, batch-padded, flattened input: (T*Bp, F).
    x_tm = jnp.pad(jnp.transpose(x, (1, 0, 2)), ((0, 0), (0, Bp - B), (0, 0)))
    x2d = x_tm.reshape(T * Bp, F)

    vmem = pl.BlockSpec(memory_space=pltpu.MemorySpace.VMEM)
    flops = 2 * T * Bp * (F + Hp) * 3 * Hp
    transcendentals = 3 * T * Bp * Hp
    bytes_accessed = 4 * (x2d.size + w_i3.size + w_h3.size + b_i3.size
                          + b_hn.size + T * Bp * Hp + Bp * Hp)

    out_tm, hN = pl.pallas_call(
        functools.partial(gru_kernel, matmul_dtype=matmul_dtype),
        out_shape=(jax.ShapeDtypeStruct((T, Bp, Hp), jnp.float32),
                   jax.ShapeDtypeStruct((Bp, Hp), jnp.float32)),
        in_specs=[vmem] * 5,
        out_specs=(vmem, vmem),
        scratch_shapes=[pltpu.VMEM((T * Bp, 3 * Hp), jnp.float32)],
        cost_estimate=pl.CostEstimate(flops=flops,
                                      transcendentals=transcendentals,
                                      bytes_accessed=bytes_accessed),
    )(x2d, w_i3, w_h3, b_i3, b_hn)

    gru_out = jnp.transpose(out_tm[:, :B, :H], (1, 0, 2))   # (B, T, H)
    hidden = hN[:B, :H]                                      # (B, H)
    return gru_out, hidden


def init_gru_params(key, input_feature_len, hidden_size):
    """Deterministic init; same uniform(-1/sqrt(H), 1/sqrt(H)) range as PyTorch.

    Weights are stored pre-transposed (F,H)/(H,H) so the kernel does x @ W.
    The r/z bias pairs are pre-summed (they always add); the n gate keeps
    b_in / b_hn separate because b_hn sits inside r*(...).
    """
    H, F = hidden_size, input_feature_len
    k = 1.0 / jnp.sqrt(jnp.float32(H))
    keys = jax.random.split(key, 12)          # independent keys (fixes prior reuse)
    u = lambda kk, shape: jax.random.uniform(kk, shape, jnp.float32, -k, k)
    return {
        "w_ir": u(keys[0], (F, H)),
        "w_iz": u(keys[1], (F, H)),
        "w_in": u(keys[2], (F, H)),
        "w_hr": u(keys[3], (H, H)),
        "w_hz": u(keys[4], (H, H)),
        "w_hn": u(keys[5], (H, H)),
        "b_r": u(keys[6], (1, H)) + u(keys[7], (1, H)),    # b_ir + b_hr
        "b_z": u(keys[8], (1, H)) + u(keys[9], (1, H)),    # b_iz + b_hz
        "b_in": u(keys[10], (1, H)),
        "b_hn": u(keys[11], (1, H)),
    }


def ref_gru(x, p):
    """Pure-JAX reference of the same GRU for correctness checking."""
    B, T, F = x.shape
    H = p["w_hr"].shape[1]

    def step(h, x_t):
        r = jax.nn.sigmoid(x_t @ p["w_ir"] + h @ p["w_hr"] + p["b_r"])
        z = jax.nn.sigmoid(x_t @ p["w_iz"] + h @ p["w_hz"] + p["b_z"])
        n = jnp.tanh(x_t @ p["w_in"] + p["b_in"] + r * (h @ p["w_hn"] + p["b_hn"]))
        h_new = (1.0 - z) * n + z * h
        return h_new, h_new

    h0 = jnp.zeros((B, H), jnp.float32)
    hN, outs = lax.scan(step, h0, jnp.swapaxes(x, 0, 1))
    return jnp.swapaxes(outs, 0, 1), hN


if __name__ == "__main__":
    # Small shapes consistent with the module: batch=2, seq=8, features=4, hidden=32.
    B, T, F, H = 2, 8, 4, 32
    key = jax.random.PRNGKey(0)
    k_x, k_p = jax.random.split(key)
    x = jax.random.normal(k_x, (B, T, F), jnp.float32)
    params = init_gru_params(k_p, F, H)

    gru_out, hidden = rnn_encoder_forward(x, params)
    gru_out = jax.block_until_ready(gru_out)
    hidden = jax.block_until_ready(hidden)

    ref_out, ref_hidden = ref_gru(x, params)
    assert gru_out.shape == (B, T, H) and hidden.shape == (B, H)
    assert jnp.allclose(gru_out, ref_out, atol=1e-5, rtol=1e-5)
    assert jnp.allclose(hidden, ref_hidden, atol=1e-5, rtol=1e-5)

    print("KERNEL_OK")
</pallas_src>

<mosaic_0001>
module attributes {stable_mosaic.version = 11 : i64} {
  func.func @gru_kernel(%arg0: memref<64x4xf32, #tpu.memory_space<vmem>>, %arg1: memref<4x384xf32, #tpu.memory_space<vmem>>, %arg2: memref<128x384xf32, #tpu.memory_space<vmem>>, %arg3: memref<1x384xf32, #tpu.memory_space<vmem>>, %arg4: memref<1x128xf32, #tpu.memory_space<vmem>>, %arg5: memref<8x8x128xf32, #tpu.memory_space<vmem>>, %arg6: memref<8x128xf32, #tpu.memory_space<vmem>>, %arg7: memref<64x384xf32, #tpu.memory_space<vmem>>) attributes {dimension_semantics = [], scalar_prefetch = 0 : i64, scratch_operands = 1 : i64, tpu.core_type = #tpu.core_type<tc>} {
    %c0 = arith.constant 0 : index
    %c0_0 = arith.constant 0 : index
    %0 = vector.load %arg0[%c0, %c0_0] : memref<64x4xf32, #tpu.memory_space<vmem>>, vector<64x4xf32>
    %c0_1 = arith.constant 0 : index
    %c0_2 = arith.constant 0 : index
    %1 = vector.load %arg1[%c0_1, %c0_2] : memref<4x384xf32, #tpu.memory_space<vmem>>, vector<4x384xf32>
    %cst = arith.constant dense<0.000000e+00> : vector<64x384xf32>
    %2 = tpu.matmul %0, %1, %cst {dimension_numbers = #tpu.dot_dimension_numbers<[1], [0], [0], [1], [0, 0, 1, 1], [], []>} : vector<64x4xf32>, vector<4x384xf32>, vector<64x384xf32> -> vector<64x384xf32>
    %c0_3 = arith.constant 0 : index
    %c0_4 = arith.constant 0 : index
    %3 = vector.load %arg3[%c0_3, %c0_4] : memref<1x384xf32, #tpu.memory_space<vmem>>, vector<1x384xf32>
    %4 = vector.broadcast %3 : vector<1x384xf32> to vector<64x384xf32>
    %5 = arith.addf %2, %4 : vector<64x384xf32>
    %c0_5 = arith.constant 0 : index
    %c0_6 = arith.constant 0 : index
    %6 = vector.load %arg7[%c0_5, %c0_6] : memref<64x384xf32, #tpu.memory_space<vmem>>, vector<64x384xf32>
    tpu.vector_store %arg7[%c0_5, %c0_6], %5 {strides = array<i32>} : memref<64x384xf32, #tpu.memory_space<vmem>>, vector<64x384xf32>,
    %c0_7 = arith.constant 0 : index
    %c0_8 = arith.constant 0 : index
    %7 = vector.load %arg2[%c0_7, %c0_8] : memref<128x384xf32, #tpu.memory_space<vmem>>, vector<128x384xf32>
    %c0_9 = arith.constant 0 : index
    %c0_10 = arith.constant 0 : index
    %8 = vector.load %arg4[%c0_9, %c0_10] : memref<1x128xf32, #tpu.memory_space<vmem>>, vector<1x128xf32>
    %9 = vector.shape_cast %8 : vector<1x128xf32> to vector<1x128xf32>
    %10 = vector.broadcast %9 : vector<1x128xf32> to vector<8x128xf32>
    %cst_11 = arith.constant 0.000000e+00 : f32
    %11 = vector.broadcast %cst_11 : f32 to vector<8x128xf32>
    %c0_i32 = arith.constant 0 : i32
    %c8_i32 = arith.constant 8 : i32
    %12 = arith.muli %c0_i32, %c8_i32 : i32
    %13 = arith.index_cast %12 : i32 to index
    %c0_12 = arith.constant 0 : index
    %14 = vector.load %arg7[%13, %c0_12] : memref<64x384xf32, #tpu.memory_space<vmem>>, vector<8x384xf32>
    %cst_13 = arith.constant dense<0.000000e+00> : vector<8x384xf32>
    %15 = tpu.matmul %11, %7, %cst_13 {dimension_numbers = #tpu.dot_dimension_numbers<[1], [0], [0], [1], [0, 0, 1, 1], [], []>} : vector<8x128xf32>, vector<128x384xf32>, vector<8x384xf32> -> vector<8x384xf32>
    %16 = vector.extract_strided_slice %14 {offsets = [0, 0], sizes = [8, 128], strides = [1, 1]} : vector<8x384xf32> to vector<8x128xf32>
    %17 = vector.extract_strided_slice %15 {offsets = [0, 0], sizes = [8, 128], strides = [1, 1]} : vector<8x384xf32> to vector<8x128xf32>
    %18 = arith.addf %16, %17 : vector<8x128xf32>
    %19 = arith.negf %18 : vector<8x128xf32>
    %20 = math.exp %19 : vector<8x128xf32>
    %cst_14 = arith.constant 1.000000e+00 : f32
    %21 = vector.broadcast %cst_14 : f32 to vector<8x128xf32>
    %22 = arith.addf %21, %20 : vector<8x128xf32>
    %23 = arith.divf %21, %22 : vector<8x128xf32>
    %24 = vector.extract_strided_slice %14 {offsets = [0, 128], sizes = [8, 128], strides = [1, 1]} : vector<8x384xf32> to vector<8x128xf32>
    %25 = vector.extract_strided_slice %15 {offsets = [0, 128], sizes = [8, 128], strides = [1, 1]} : vector<8x384xf32> to vector<8x128xf32>
    %26 = arith.addf %24, %25 : vector<8x128xf32>
    %27 = arith.negf %26 : vector<8x128xf32>
    %28 = math.exp %27 : vector<8x128xf32>
    %cst_15 = arith.constant 1.000000e+00 : f32
    %29 = vector.broadcast %cst_15 : f32 to vector<8x128xf32>
    %30 = arith.addf %29, %28 : vector<8x128xf32>
    %31 = arith.divf %29, %30 : vector<8x128xf32>
    %32 = vector.extract_strided_slice %14 {offsets = [0, 256], sizes = [8, 128], strides = [1, 1]} : vector<8x384xf32> to vector<8x128xf32>
    %33 = vector.extract_strided_slice %15 {offsets = [0, 256], sizes = [8, 128], strides = [1, 1]} : vector<8x384xf32> to vector<8x128xf32>
    %34 = arith.addf %33, %10 : vector<8x128xf32>
    %35 = arith.mulf %23, %34 : vector<8x128xf32>
    %36 = arith.addf %32, %35 : vector<8x128xf32>
    %37 = math.tanh %36 : vector<8x128xf32>
    %cst_16 = arith.constant 1.000000e+00 : f32
    %38 = vector.broadcast %cst_16 : f32 to vector<8x128xf32>
    %39 = arith.subf %38, %31 : vector<8x128xf32>
    %40 = arith.mulf %39, %37 : vector<8x128xf32>
    %41 = arith.mulf %31, %11 : vector<8x128xf32>
    %42 = arith.addf %40, %41 : vector<8x128xf32>
    %43 = arith.index_cast %c0_i32 : i32 to index
    %c0_17 = arith.constant 0 : index
    %c0_18 = arith.constant 0 : index
    %44 = vector.load %arg5[%43, %c0_17, %c0_18] : memref<8x8x128xf32, #tpu.memory_space<vmem>>, vector<1x8x128xf32>
    %45 = vector.shape_cast %44 : vector<1x8x128xf32> to vector<8x128xf32>
    %46 = vector.shape_cast %42 : vector<8x128xf32> to vector<1x8x128xf32>
    tpu.vector_store %arg5[%43, %c0_17, %c0_18], %46 {strides = array<i32>} : memref<8x8x128xf32, #tpu.memory_space<vmem>>, vector<1x8x128xf32>,
    %c1_i32 = arith.constant 1 : i32
    %c8_i32_19 = arith.constant 8 : i32
    %47 = arith.muli %c1_i32, %c8_i32_19 : i32
    %48 = arith.index_cast %47 : i32 to index
    %c0_20 = arith.constant 0 : index
    %49 = vector.load %arg7[%48, %c0_20] : memref<64x384xf32, #tpu.memory_space<vmem>>, vector<8x384xf32>
    %cst_21 = arith.constant dense<0.000000e+00> : vector<8x384xf32>
    %50 = tpu.matmul %42, %7, %cst_21 {dimension_numbers = #tpu.dot_dimension_numbers<[1], [0], [0], [1], [0, 0, 1, 1], [], []>} : vector<8x128xf32>, vector<128x384xf32>, vector<8x384xf32> -> vector<8x384xf32>
    %51 = vector.extract_strided_slice %49 {offsets = [0, 0], sizes = [8, 128], strides = [1, 1]} : vector<8x384xf32> to vector<8x128xf32>
    %52 = vector.extract_strided_slice %50 {offsets = [0, 0], sizes = [8, 128], strides = [1, 1]} : vector<8x384xf32> to vector<8x128xf32>
    %53 = arith.addf %51, %52 : vector<8x128xf32>
    %54 = arith.negf %53 : vector<8x128xf32>
    %55 = math.exp %54 : vector<8x128xf32>
    %cst_22 = arith.constant 1.000000e+00 : f32
    %56 = vector.broadcast %cst_22 : f32 to vector<8x128xf32>
    %57 = arith.addf %56, %55 : vector<8x128xf32>
    %58 = arith.divf %56, %57 : vector<8x128xf32>
    %59 = vector.extract_strided_slice %49 {offsets = [0, 128], sizes = [8, 128], strides = [1, 1]} : vector<8x384xf32> to vector<8x128xf32>
    %60 = vector.extract_strided_slice %50 {offsets = [0, 128], sizes = [8, 128], strides = [1, 1]} : vector<8x384xf32> to vector<8x128xf32>
    %61 = arith.addf %59, %60 : vector<8x128xf32>
    %62 = arith.negf %61 : vector<8x128xf32>
    %63 = math.exp %62 : vector<8x128xf32>
    %cst_23 = arith.constant 1.000000e+00 : f32
    %64 = vector.broadcast %cst_23 : f32 to vector<8x128xf32>
    %65 = arith.addf %64, %63 : vector<8x128xf32>
    %66 = arith.divf %64, %65 : vector<8x128xf32>
    %67 = vector.extract_strided_slice %49 {offsets = [0, 256], sizes = [8, 128], strides = [1, 1]} : vector<8x384xf32> to vector<8x128xf32>
    %68 = vector.extract_strided_slice %50 {offsets = [0, 256], sizes = [8, 128], strides = [1, 1]} : vector<8x384xf32> to vector<8x128xf32>
    %69 = arith.addf %68, %10 : vector<8x128xf32>
    %70 = arith.mulf %58, %69 : vector<8x128xf32>
    %71 = arith.addf %67, %70 : vector<8x128xf32>
    %72 = math.tanh %71 : vector<8x128xf32>
    %cst_24 = arith.constant 1.000000e+00 : f32
    %73 = vector.broadcast %cst_24 : f32 to vector<8x128xf32>
    %74 = arith.subf %73, %66 : vector<8x128xf32>
    %75 = arith.mulf %74, %72 : vector<8x128xf32>
    %76 = arith.mulf %66, %42 : vector<8x128xf32>
    %77 = arith.addf %75, %76 : vector<8x128xf32>
    %78 = arith.index_cast %c1_i32 : i32 to index
    %c0_25 = arith.constant 0 : index
    %c0_26 = arith.constant 0 : index
    %79 = vector.load %arg5[%78, %c0_25, %c0_26] : memref<8x8x128xf32, #tpu.memory_space<vmem>>, vector<1x8x128xf32>
    %80 = vector.shape_cast %79 : vector<1x8x128xf32> to vector<8x128xf32>
    %81 = vector.shape_cast %77 : vector<8x128xf32> to vector<1x8x128xf32>
    tpu.vector_store %arg5[%78, %c0_25, %c0_26], %81 {strides = array<i32>} : memref<8x8x128xf32, #tpu.memory_space<vmem>>, vector<1x8x128xf32>,
    %c2_i32 = arith.constant 2 : i32
    %c8_i32_27 = arith.constant 8 : i32
    %82 = arith.muli %c2_i32, %c8_i32_27 : i32
    %83 = arith.index_cast %82 : i32 to index
    %c0_28 = arith.constant 0 : index
    %84 = vector.load %arg7[%83, %c0_28] : memref<64x384xf32, #tpu.memory_space<vmem>>, vector<8x384xf32>
    %cst_29 = arith.constant dense<0.000000e+00> : vector<8x384xf32>
    %85 = tpu.matmul %77, %7, %cst_29 {dimension_numbers = #tpu.dot_dimension_numbers<[1], [0], [0], [1], [0, 0, 1, 1], [], []>} : vector<8x128xf32>, vector<128x384xf32>, vector<8x384xf32> -> vector<8x384xf32>
    %86 = vector.extract_strided_slice %84 {offsets = [0, 0], sizes = [8, 128], strides = [1, 1]} : vector<8x384xf32> to vector<8x128xf32>
    %87 = vector.extract_strided_slice %85 {offsets = [0, 0], sizes = [8, 128], strides = [1, 1]} : vector<8x384xf32> to vector<8x128xf32>
    %88 = arith.addf %86, %87 : vector<8x128xf32>
    %89 = arith.negf %88 : vector<8x128xf32>
    %90 = math.exp %89 : vector<8x128xf32>
    %cst_30 = arith.constant 1.000000e+00 : f32
    %91 = vector.broadcast %cst_30 : f32 to vector<8x128xf32>
    %92 = arith.addf %91, %90 : vector<8x128xf32>
    %93 = arith.divf %91, %92 : vector<8x128xf32>
    %94 = vector.extract_strided_slice %84 {offsets = [0, 128], sizes = [8, 128], strides = [1, 1]} : vector<8x384xf32> to vector<8x128xf32>
    %95 = vector.extract_strided_slice %85 {offsets = [0, 128], sizes = [8, 128], strides = [1, 1]} : vector<8x384xf32> to vector<8x128xf32>
    %96 = arith.addf %94, %95 : vector<8x128xf32>
    %97 = arith.negf %96 : vector<8x128xf32>
    %98 = math.exp %97 : vector<8x128xf32>
    %cst_31 = arith.constant 1.000000e+00 : f32
    %99 = vector.broadcast %cst_31 : f32 to vector<8x128xf32>
    %100 = arith.addf %99, %98 : vector<8x128xf32>
    %101 = arith.divf %99, %100 : vector<8x128xf32>
    %102 = vector.extract_strided_slice %84 {offsets = [0, 256], sizes = [8, 128], strides = [1, 1]} : vector<8x384xf32> to vector<8x128xf32>
    %103 = vector.extract_strided_slice %85 {offsets = [0, 256], sizes = [8, 128], strides = [1, 1]} : vector<8x384xf32> to vector<8x128xf32>
    %104 = arith.addf %103, %10 : vector<8x128xf32>
    %105 = arith.mulf %93, %104 : vector<8x128xf32>
    %106 = arith.addf %102, %105 : vector<8x128xf32>
    %107 = math.tanh %106 : vector<8x128xf32>
    %cst_32 = arith.constant 1.000000e+00 : f32
    %108 = vector.broadcast %cst_32 : f32 to vector<8x128xf32>
    %109 = arith.subf %108, %101 : vector<8x128xf32>
    %110 = arith.mulf %109, %107 : vector<8x128xf32>
    %111 = arith.mulf %101, %77 : vector<8x128xf32>
    %112 = arith.addf %110, %111 : vector<8x128xf32>
    %113 = arith.index_cast %c2_i32 : i32 to index
    %c0_33 = arith.constant 0 : index
    %c0_34 = arith.constant 0 : index
    %114 = vector.load %arg5[%113, %c0_33, %c0_34] : memref<8x8x128xf32, #tpu.memory_space<vmem>>, vector<1x8x128xf32>
    %115 = vector.shape_cast %114 : vector<1x8x128xf32> to vector<8x128xf32>
    %116 = vector.shape_cast %112 : vector<8x128xf32> to vector<1x8x128xf32>
    tpu.vector_store %arg5[%113, %c0_33, %c0_34], %116 {strides = array<i32>} : memref<8x8x128xf32, #tpu.memory_space<vmem>>, vector<1x8x128xf32>,
    %c3_i32 = arith.constant 3 : i32
    %c8_i32_35 = arith.constant 8 : i32
    %117 = arith.muli %c3_i32, %c8_i32_35 : i32
    %118 = arith.index_cast %117 : i32 to index
    %c0_36 = arith.constant 0 : index
    %119 = vector.load %arg7[%118, %c0_36] : memref<64x384xf32, #tpu.memory_space<vmem>>, vector<8x384xf32>
    %cst_37 = arith.constant dense<0.000000e+00> : vector<8x384xf32>
    %120 = tpu.matmul %112, %7, %cst_37 {dimension_numbers = #tpu.dot_dimension_numbers<[1], [0], [0], [1], [0, 0, 1, 1], [], []>} : vector<8x128xf32>, vector<128x384xf32>, vector<8x384xf32> -> vector<8x384xf32>
    %121 = vector.extract_strided_slice %119 {offsets = [0, 0], sizes = [8, 128], strides = [1, 1]} : vector<8x384xf32> to vector<8x128xf32>
    %122 = vector.extract_strided_slice %120 {offsets = [0, 0], sizes = [8, 128], strides = [1, 1]} : vector<8x384xf32> to vector<8x128xf32>
    %123 = arith.addf %121, %122 : vector<8x128xf32>
    %124 = arith.negf %123 : vector<8x128xf32>
    %125 = math.exp %124 : vector<8x128xf32>
    %cst_38 = arith.constant 1.000000e+00 : f32
    %126 = vector.broadcast %cst_38 : f32 to vector<8x128xf32>
    %127 = arith.addf %126, %125 : vector<8x128xf32>
    %128 = arith.divf %126, %127 : vector<8x128xf32>
    %129 = vector.extract_strided_slice %119 {offsets = [0, 128], sizes = [8, 128], strides = [1, 1]} : vector<8x384xf32> to vector<8x128xf32>
    %130 = vector.extract_strided_slice %120 {offsets = [0, 128], sizes = [8, 128], strides = [1, 1]} : vector<8x384xf32> to vector<8x128xf32>
    %131 = arith.addf %129, %130 : vector<8x128xf32>
    %132 = arith.negf %131 : vector<8x128xf32>
    %133 = math.exp %132 : vector<8x128xf32>
    %cst_39 = arith.constant 1.000000e+00 : f32
    %134 = vector.broadcast %cst_39 : f32 to vector<8x128xf32>
    %135 = arith.addf %134, %133 : vector<8x128xf32>
    %136 = arith.divf %134, %135 : vector<8x128xf32>
    %137 = vector.extract_strided_slice %119 {offsets = [0, 256], sizes = [8, 128], strides = [1, 1]} : vector<8x384xf32> to vector<8x128xf32>
    %138 = vector.extract_strided_slice %120 {offsets = [0, 256], sizes = [8, 128], strides = [1, 1]} : vector<8x384xf32> to vector<8x128xf32>
    %139 = arith.addf %138, %10 : vector<8x128xf32>
    %140 = arith.mulf %128, %139 : vector<8x128xf32>
    %141 = arith.addf %137, %140 : vector<8x128xf32>
    %142 = math.tanh %141 : vector<8x128xf32>
    %cst_40 = arith.constant 1.000000e+00 : f32
    %143 = vector.broadcast %cst_40 : f32 to vector<8x128xf32>
    %144 = arith.subf %143, %136 : vector<8x128xf32>
    %145 = arith.mulf %144, %142 : vector<8x128xf32>
    %146 = arith.mulf %136, %112 : vector<8x128xf32>
    %147 = arith.addf %145, %146 : vector<8x128xf32>
    %148 = arith.index_cast %c3_i32 : i32 to index
    %c0_41 = arith.constant 0 : index
    %c0_42 = arith.constant 0 : index
    %149 = vector.load %arg5[%148, %c0_41, %c0_42] : memref<8x8x128xf32, #tpu.memory_space<vmem>>, vector<1x8x128xf32>
    %150 = vector.shape_cast %149 : vector<1x8x128xf32> to vector<8x128xf32>
    %151 = vector.shape_cast %147 : vector<8x128xf32> to vector<1x8x128xf32>
    tpu.vector_store %arg5[%148, %c0_41, %c0_42], %151 {strides = array<i32>} : memref<8x8x128xf32, #tpu.memory_space<vmem>>, vector<1x8x128xf32>,
    %c4_i32 = arith.constant 4 : i32
    %c8_i32_43 = arith.constant 8 : i32
    %152 = arith.muli %c4_i32, %c8_i32_43 : i32
    %153 = arith.index_cast %152 : i32 to index
    %c0_44 = arith.constant 0 : index
    %154 = vector.load %arg7[%153, %c0_44] : memref<64x384xf32, #tpu.memory_space<vmem>>, vector<8x384xf32>
    %cst_45 = arith.constant dense<0.000000e+00> : vector<8x384xf32>
    %155 = tpu.matmul %147, %7, %cst_45 {dimension_numbers = #tpu.dot_dimension_numbers<[1], [0], [0], [1], [0, 0, 1, 1], [], []>} : vector<8x128xf32>, vector<128x384xf32>, vector<8x384xf32> -> vector<8x384xf32>
    %156 = vector.extract_strided_slice %154 {offsets = [0, 0], sizes = [8, 128], strides = [1, 1]} : vector<8x384xf32> to vector<8x128xf32>
    %157 = vector.extract_strided_slice %155 {offsets = [0, 0], sizes = [8, 128], strides = [1, 1]} : vector<8x384xf32> to vector<8x128xf32>
    %158 = arith.addf %156, %157 : vector<8x128xf32>
    %159 = arith.negf %158 : vector<8x128xf32>
    %160 = math.exp %159 : vector<8x128xf32>
    %cst_46 = arith.constant 1.000000e+00 : f32
    %161 = vector.broadcast %cst_46 : f32 to vector<8x128xf32>
    %162 = arith.addf %161, %160 : vector<8x128xf32>
    %163 = arith.divf %161, %162 : vector<8x128xf32>
    %164 = vector.extract_strided_slice %154 {offsets = [0, 128], sizes = [8, 128], strides = [1, 1]} : vector<8x384xf32> to vector<8x128xf32>
    %165 = vector.extract_strided_slice %155 {offsets = [0, 128], sizes = [8, 128], strides = [1, 1]} : vector<8x384xf32> to vector<8x128xf32>
    %166 = arith.addf %164, %165 : vector<8x128xf32>
    %167 = arith.negf %166 : vector<8x128xf32>
    %168 = math.exp %167 : vector<8x128xf32>
    %cst_47 = arith.constant 1.000000e+00 : f32
    %169 = vector.broadcast %cst_47 : f32 to vector<8x128xf32>
    %170 = arith.addf %169, %168 : vector<8x128xf32>
    %171 = arith.divf %169, %170 : vector<8x128xf32>
    %172 = vector.extract_strided_slice %154 {offsets = [0, 256], sizes = [8, 128], strides = [1, 1]} : vector<8x384xf32> to vector<8x128xf32>
    %173 = vector.extract_strided_slice %155 {offsets = [0, 256], sizes = [8, 128], strides = [1, 1]} : vector<8x384xf32> to vector<8x128xf32>
    %174 = arith.addf %173, %10 : vector<8x128xf32>
    %175 = arith.mulf %163, %174 : vector<8x128xf32>
    %176 = arith.addf %172, %175 : vector<8x128xf32>
    %177 = math.tanh %176 : vector<8x128xf32>
    %cst_48 = arith.constant 1.000000e+00 : f32
    %178 = vector.broadcast %cst_48 : f32 to vector<8x128xf32>
    %179 = arith.subf %178, %171 : vector<8x128xf32>
    %180 = arith.mulf %179, %177 : vector<8x128xf32>
    %181 = arith.mulf %171, %147 : vector<8x128xf32>
    %182 = arith.addf %180, %181 : vector<8x128xf32>
    %183 = arith.index_cast %c4_i32 : i32 to index
    %c0_49 = arith.constant 0 : index
    %c0_50 = arith.constant 0 : index
    %184 = vector.load %arg5[%183, %c0_49, %c0_50] : memref<8x8x128xf32, #tpu.memory_space<vmem>>, vector<1x8x128xf32>
    %185 = vector.shape_cast %184 : vector<1x8x128xf32> to vector<8x128xf32>
    %186 = vector.shape_cast %182 : vector<8x128xf32> to vector<1x8x128xf32>
    tpu.vector_store %arg5[%183, %c0_49, %c0_50], %186 {strides = array<i32>} : memref<8x8x128xf32, #tpu.memory_space<vmem>>, vector<1x8x128xf32>,
    %c5_i32 = arith.constant 5 : i32
    %c8_i32_51 = arith.constant 8 : i32
    %187 = arith.muli %c5_i32, %c8_i32_51 : i32
    %188 = arith.index_cast %187 : i32 to index
    %c0_52 = arith.constant 0 : index
    %189 = vector.load %arg7[%188, %c0_52] : memref<64x384xf32, #tpu.memory_space<vmem>>, vector<8x384xf32>
    %cst_53 = arith.constant dense<0.000000e+00> : vector<8x384xf32>
    %190 = tpu.matmul %182, %7, %cst_53 {dimension_numbers = #tpu.dot_dimension_numbers<[1], [0], [0], [1], [0, 0, 1, 1], [], []>} : vector<8x128xf32>, vector<128x384xf32>, vector<8x384xf32> -> vector<8x384xf32>
    %191 = vector.extract_strided_slice %189 {offsets = [0, 0], sizes = [8, 128], strides = [1, 1]} : vector<8x384xf32> to vector<8x128xf32>
    %192 = vector.extract_strided_slice %190 {offsets = [0, 0], sizes = [8, 128], strides = [1, 1]} : vector<8x384xf32> to vector<8x128xf32>
    %193 = arith.addf %191, %192 : vector<8x128xf32>
    %194 = arith.negf %193 : vector<8x128xf32>
    %195 = math.exp %194 : vector<8x128xf32>
    %cst_54 = arith.constant 1.000000e+00 : f32
    %196 = vector.broadcast %cst_54 : f32 to vector<8x128xf32>
    %197 = arith.addf %196, %195 : vector<8x128xf32>
    %198 = arith.divf %196, %197 : vector<8x128xf32>
    %199 = vector.extract_strided_slice %189 {offsets = [0, 128], sizes = [8, 128], strides = [1, 1]} : vector<8x384xf32> to vector<8x128xf32>
    %200 = vector.extract_strided_slice %190 {offsets = [0, 128], sizes = [8, 128], strides = [1, 1]} : vector<8x384xf32> to vector<8x128xf32>
    %201 = arith.addf %199, %200 : vector<8x128xf32>
    %202 = arith.negf %201 : vector<8x128xf32>
    %203 = math.exp %202 : vector<8x128xf32>
    %cst_55 = arith.constant 1.000000e+00 : f32
    %204 = vector.broadcast %cst_55 : f32 to vector<8x128xf32>
    %205 = arith.addf %204, %203 : vector<8x128xf32>
    %206 = arith.divf %204, %205 : vector<8x128xf32>
    %207 = vector.extract_strided_slice %189 {offsets = [0, 256], sizes = [8, 128], strides = [1, 1]} : vector<8x384xf32> to vector<8x128xf32>
    %208 = vector.extract_strided_slice %190 {offsets = [0, 256], sizes = [8, 128], strides = [1, 1]} : vector<8x384xf32> to vector<8x128xf32>
    %209 = arith.addf %208, %10 : vector<8x128xf32>
    %210 = arith.mulf %198, %209 : vector<8x128xf32>
    %211 = arith.addf %207, %210 : vector<8x128xf32>
    %212 = math.tanh %211 : vector<8x128xf32>
    %cst_56 = arith.constant 1.000000e+00 : f32
    %213 = vector.broadcast %cst_56 : f32 to vector<8x128xf32>
    %214 = arith.subf %213, %206 : vector<8x128xf32>
    %215 = arith.mulf %214, %212 : vector<8x128xf32>
    %216 = arith.mulf %206, %182 : vector<8x128xf32>
    %217 = arith.addf %215, %216 : vector<8x128xf32>
    %218 = arith.index_cast %c5_i32 : i32 to index
    %c0_57 = arith.constant 0 : index
    %c0_58 = arith.constant 0 : index
    %219 = vector.load %arg5[%218, %c0_57, %c0_58] : memref<8x8x128xf32, #tpu.memory_space<vmem>>, vector<1x8x128xf32>
    %220 = vector.shape_cast %219 : vector<1x8x128xf32> to vector<8x128xf32>
    %221 = vector.shape_cast %217 : vector<8x128xf32> to vector<1x8x128xf32>
    tpu.vector_store %arg5[%218, %c0_57, %c0_58], %221 {strides = array<i32>} : memref<8x8x128xf32, #tpu.memory_space<vmem>>, vector<1x8x128xf32>,
    %c6_i32 = arith.constant 6 : i32
    %c8_i32_59 = arith.constant 8 : i32
    %222 = arith.muli %c6_i32, %c8_i32_59 : i32
    %223 = arith.index_cast %222 : i32 to index
    %c0_60 = arith.constant 0 : index
    %224 = vector.load %arg7[%223, %c0_60] : memref<64x384xf32, #tpu.memory_space<vmem>>, vector<8x384xf32>
    %cst_61 = arith.constant dense<0.000000e+00> : vector<8x384xf32>
    %225 = tpu.matmul %217, %7, %cst_61 {dimension_numbers = #tpu.dot_dimension_numbers<[1], [0], [0], [1], [0, 0, 1, 1], [], []>} : vector<8x128xf32>, vector<128x384xf32>, vector<8x384xf32> -> vector<8x384xf32>
    %226 = vector.extract_strided_slice %224 {offsets = [0, 0], sizes = [8, 128], strides = [1, 1]} : vector<8x384xf32> to vector<8x128xf32>
    %227 = vector.extract_strided_slice %225 {offsets = [0, 0], sizes = [8, 128], strides = [1, 1]} : vector<8x384xf32> to vector<8x128xf32>
    %228 = arith.addf %226, %227 : vector<8x128xf32>
    %229 = arith.negf %228 : vector<8x128xf32>
    %230 = math.exp %229 : vector<8x128xf32>
    %cst_62 = arith.constant 1.000000e+00 : f32
    %231 = vector.broadcast %cst_62 : f32 to vector<8x128xf32>
    %232 = arith.addf %231, %230 : vector<8x128xf32>
    %233 = arith.divf %231, %232 : vector<8x128xf32>
    %234 = vector.extract_strided_slice %224 {offsets = [0, 128], sizes = [8, 128], strides = [1, 1]} : vector<8x384xf32> to vector<8x128xf32>
    %235 = vector.extract_strided_slice %225 {offsets = [0, 128], sizes = [8, 128], strides = [1, 1]} : vector<8x384xf32> to vector<8x128xf32>
    %236 = arith.addf %234, %235 : vector<8x128xf32>
    %237 = arith.negf %236 : vector<8x128xf32>
    %238 = math.exp %237 : vector<8x128xf32>
    %cst_63 = arith.constant 1.000000e+00 : f32
    %239 = vector.broadcast %cst_63 : f32 to vector<8x128xf32>
    %240 = arith.addf %239, %238 : vector<8x128xf32>
    %241 = arith.divf %239, %240 : vector<8x128xf32>
    %242 = vector.extract_strided_slice %224 {offsets = [0, 256], sizes = [8, 128], strides = [1, 1]} : vector<8x384xf32> to vector<8x128xf32>
    %243 = vector.extract_strided_slice %225 {offsets = [0, 256], sizes = [8, 128], strides = [1, 1]} : vector<8x384xf32> to vector<8x128xf32>
    %244 = arith.addf %243, %10 : vector<8x128xf32>
    %245 = arith.mulf %233, %244 : vector<8x128xf32>
    %246 = arith.addf %242, %245 : vector<8x128xf32>
    %247 = math.tanh %246 : vector<8x128xf32>
    %cst_64 = arith.constant 1.000000e+00 : f32
    %248 = vector.broadcast %cst_64 : f32 to vector<8x128xf32>
    %249 = arith.subf %248, %241 : vector<8x128xf32>
    %250 = arith.mulf %249, %247 : vector<8x128xf32>
    %251 = arith.mulf %241, %217 : vector<8x128xf32>
    %252 = arith.addf %250, %251 : vector<8x128xf32>
    %253 = arith.index_cast %c6_i32 : i32 to index
    %c0_65 = arith.constant 0 : index
    %c0_66 = arith.constant 0 : index
    %254 = vector.load %arg5[%253, %c0_65, %c0_66] : memref<8x8x128xf32, #tpu.memory_space<vmem>>, vector<1x8x128xf32>
    %255 = vector.shape_cast %254 : vector<1x8x128xf32> to vector<8x128xf32>
    %256 = vector.shape_cast %252 : vector<8x128xf32> to vector<1x8x128xf32>
    tpu.vector_store %arg5[%253, %c0_65, %c0_66], %256 {strides = array<i32>} : memref<8x8x128xf32, #tpu.memory_space<vmem>>, vector<1x8x128xf32>,
    %c7_i32 = arith.constant 7 : i32
    %c8_i32_67 = arith.constant 8 : i32
    %257 = arith.muli %c7_i32, %c8_i32_67 : i32
    %258 = arith.index_cast %257 : i32 to index
    %c0_68 = arith.constant 0 : index
    %259 = vector.load %arg7[%258, %c0_68] : memref<64x384xf32, #tpu.memory_space<vmem>>, vector<8x384xf32>
    %cst_69 = arith.constant dense<0.000000e+00> : vector<8x384xf32>
    %260 = tpu.matmul %252, %7, %cst_69 {dimension_numbers = #tpu.dot_dimension_numbers<[1], [0], [0], [1], [0, 0, 1, 1], [], []>} : vector<8x128xf32>, vector<128x384xf32>, vector<8x384xf32> -> vector<8x384xf32>
    %261 = vector.extract_strided_slice %259 {offsets = [0, 0], sizes = [8, 128], strides = [1, 1]} : vector<8x384xf32> to vector<8x128xf32>
    %262 = vector.extract_strided_slice %260 {offsets = [0, 0], sizes = [8, 128], strides = [1, 1]} : vector<8x384xf32> to vector<8x128xf32>
    %263 = arith.addf %261, %262 : vector<8x128xf32>
    %264 = arith.negf %263 : vector<8x128xf32>
    %265 = math.exp %264 : vector<8x128xf32>
    %cst_70 = arith.constant 1.000000e+00 : f32
    %266 = vector.broadcast %cst_70 : f32 to vector<8x128xf32>
    %267 = arith.addf %266, %265 : vector<8x128xf32>
    %268 = arith.divf %266, %267 : vector<8x128xf32>
    %269 = vector.extract_strided_slice %259 {offsets = [0, 128], sizes = [8, 128], strides = [1, 1]} : vector<8x384xf32> to vector<8x128xf32>
    %270 = vector.extract_strided_slice %260 {offsets = [0, 128], sizes = [8, 128], strides = [1, 1]} : vector<8x384xf32> to vector<8x128xf32>
    %271 = arith.addf %269, %270 : vector<8x128xf32>
    %272 = arith.negf %271 : vector<8x128xf32>
    %273 = math.exp %272 : vector<8x128xf32>
    %cst_71 = arith.constant 1.000000e+00 : f32
    %274 = vector.broadcast %cst_71 : f32 to vector<8x128xf32>
    %275 = arith.addf %274, %273 : vector<8x128xf32>
    %276 = arith.divf %274, %275 : vector<8x128xf32>
    %277 = vector.extract_strided_slice %259 {offsets = [0, 256], sizes = [8, 128], strides = [1, 1]} : vector<8x384xf32> to vector<8x128xf32>
    %278 = vector.extract_strided_slice %260 {offsets = [0, 256], sizes = [8, 128], strides = [1, 1]} : vector<8x384xf32> to vector<8x128xf32>
    %279 = arith.addf %278, %10 : vector<8x128xf32>
    %280 = arith.mulf %268, %279 : vector<8x128xf32>
    %281 = arith.addf %277, %280 : vector<8x128xf32>
    %282 = math.tanh %281 : vector<8x128xf32>
    %cst_72 = arith.constant 1.000000e+00 : f32
    %283 = vector.broadcast %cst_72 : f32 to vector<8x128xf32>
    %284 = arith.subf %283, %276 : vector<8x128xf32>
    %285 = arith.mulf %284, %282 : vector<8x128xf32>
    %286 = arith.mulf %276, %252 : vector<8x128xf32>
    %287 = arith.addf %285, %286 : vector<8x128xf32>
    %288 = arith.index_cast %c7_i32 : i32 to index
    %c0_73 = arith.constant 0 : index
    %c0_74 = arith.constant 0 : index
    %289 = vector.load %arg5[%288, %c0_73, %c0_74] : memref<8x8x128xf32, #tpu.memory_space<vmem>>, vector<1x8x128xf32>
    %290 = vector.shape_cast %289 : vector<1x8x128xf32> to vector<8x128xf32>
    %291 = vector.shape_cast %287 : vector<8x128xf32> to vector<1x8x128xf32>
    tpu.vector_store %arg5[%288, %c0_73, %c0_74], %291 {strides = array<i32>} : memref<8x8x128xf32, #tpu.memory_space<vmem>>, vector<1x8x128xf32>,
    %c8_i32_75 = arith.constant 8 : i32
    %c0_76 = arith.constant 0 : index
    %c0_77 = arith.constant 0 : index
    %292 = vector.load %arg6[%c0_76, %c0_77] : memref<8x128xf32, #tpu.memory_space<vmem>>, vector<8x128xf32>
    tpu.vector_store %arg6[%c0_76, %c0_77], %287 {strides = array<i32>} : memref<8x128xf32, #tpu.memory_space<vmem>>, vector<8x128xf32>,
    return
  }
}

</mosaic_0001>

<llo_original>
// kernel: tpu_custom_call.1
$region0: #{tpu_custom_call.1}
  #allocation0 [shape = 'u32[]', space=smem, size = 0x4, offset = 0x4, fixed_abs, tag = 'smem constant byte address 0x4 - core index']
  #allocation1 [shape = 'u32[144,128]{1,0:T(1,128)}', space=vmem, size = 0x12000, scoped, tag = 'internal scratch']
  #allocation2 [shape = 'f32[64,384]{1,0:T(8,128)}', space=vmem, size = 0x18000, scoped, tag = 'scratch operand']
  %s0 = inlined_call_operand.vmem [shape: f32[64,4], index: 0, kind: input, shape index: {}]
  %s1 = inlined_call_operand.vmem [shape: f32[4,384], index: 1, kind: input, shape index: {}]
  %s2 = inlined_call_operand.hbm [shape: f32[128,384], index: 2, kind: input, shape index: {}]
  %s3 = inlined_call_operand.vmem [shape: f32[1,384], index: 3, kind: input, shape index: {}]
  %s4 = inlined_call_operand.vmem [shape: f32[1,128], index: 4, kind: input, shape index: {}]
  %s5 = inlined_call_operand.hbm [shape: f32[8,8,128], index: 5, kind: output, shape index: {0}]
  %s6 = inlined_call_operand.hbm [shape: f32[8,128], index: 6, kind: output, shape index: {1}]
  %7 = xla_tuple %s5, %s6
  %s8 = sld [smem:[#allocation0]]
  $region42: #{tpu_custom_call.1} parent=0
    _
  %s10 = ssub.s32 1, %s8
  %s11 = scalar_select 0, %s10, %s8
  $region1: #{tpu_custom_call.1} parent=0
    #allocation3 [shape = 'u8[196608]{0}', space=vmem, size = 0x30000, scoped, tag = 'input window, operand 2, single buffered']
    #allocation4 [shape = 's32[1]{0}', space=sflag, size = 0x4, scoped, tag = 'scoped memory for tpu_custom_call.1']
    #allocation5 [shape = 's32[1]{0}', space=sflag, size = 0x4, scoped, tag = 'scoped memory for tpu_custom_call.1']
    #allocation6 [shape = 'u8[32768]{0}', space=vmem, size = 0x8000, scoped, tag = 'output window, operand 0, single buffered']
    #allocation7 [shape = 'u8[4096]{0}', space=vmem, size = 0x1000, scoped, tag = 'output window, operand 1, single buffered']
    #allocation8 [shape = 's32[1]{0}', space=sflag, size = 0x4, scoped, tag = 'scoped memory for tpu_custom_call.1']
    %12 = vsyncpa [#allocation4], 0
    %13 = vsyncpa [#allocation5], 0
    %14 = vsyncpa [#allocation8], 0
    // Predicated region
    $region2: #{tpu_custom_call.1} parent=1 // pred_check
      _
    $region3: #{tpu_custom_call.1} parent=1 // pred_check_branch
      %16 = sbr.rel (0) target = $region5
    $region4: #{tpu_custom_call.1} parent=1 // pred_region
      _
    $region5: #{tpu_custom_call.1} parent=1 // pred_fallthru
      _
    // Predicated region
    $region6: #{tpu_custom_call.1} parent=1 // pred_check
      _
    $region7: #{tpu_custom_call.1} parent=1 // pred_check_branch
      %18 = sbr.rel (0) target = $region9
    $region8: #{tpu_custom_call.1} parent=1 // pred_region
      _
    $region9: #{tpu_custom_call.1} parent=1 // pred_fallthru
      _
    // Predicated region
    $region10: #{tpu_custom_call.1} parent=1 // pred_check
      _
    $region11: #{tpu_custom_call.1} parent=1 // pred_check_branch
      %20 = sbr.rel (0) target = $region13
    $region12: #{tpu_custom_call.1} parent=1 // pred_region
      %s22 = ssub.s32 6144, 6144
      %23 = vsyncadd [#allocation4], %s22
      %s24 = sshll.u32 [#allocation3], 4
      %s25 = int_to_ptr.vmem [resolvable:$true] %s24
      %30 = dma.hbm_to_vmem [thread:$0]  %s2, 6144, %s25, [#allocation4], 384, 384, 24
    $region13: #{tpu_custom_call.1} parent=1 // pred_fallthru
      _
    // Predicated region
    $region14: #{tpu_custom_call.1} parent=1 // pred_check
      _
    $region15: #{tpu_custom_call.1} parent=1 // pred_check_branch
      %32 = sbr.rel (0) target = $region17
    $region16: #{tpu_custom_call.1} parent=1 // pred_region
      _
    $region17: #{tpu_custom_call.1} parent=1 // pred_fallthru
      _
    // Predicated region
    $region18: #{tpu_custom_call.1} parent=1 // pred_check
      _
    $region19: #{tpu_custom_call.1} parent=1 // pred_check_branch
      %34 = sbr.rel (0) target = $region21
    $region20: #{tpu_custom_call.1} parent=1 // pred_region
      _
    $region21: #{tpu_custom_call.1} parent=1 // pred_fallthru
      _
    // Predicated region
    $region22: #{tpu_custom_call.1} parent=1 // pred_check
      _
    $region23: #{tpu_custom_call.1} parent=1 // pred_check_branch
      %36 = sbr.rel (0) target = $region25
    $region24: #{tpu_custom_call.1} parent=1 // pred_region
      %37 = dma.done [#allocation4], 6144
    $region25: #{tpu_custom_call.1} parent=1 // pred_fallthru
      _
    %v38 = vld [vmem:[%s0] sm:$0xff]
    %v39 = vld [vmem:[%s0 + $0x8] sm:$0xff]
    %v40 = vld [vmem:[%s0 + $0x10] sm:$0xff]
    %v41 = vld [vmem:[%s0 + $0x18] sm:$0xff]
    %v42 = vld [vmem:[%s0 + $0x20] sm:$0xff]
    %v43 = vld [vmem:[%s0 + $0x28] sm:$0xff]
    %v44 = vld [vmem:[%s0 + $0x30] sm:$0xff]
    %v45 = vld [vmem:[%s0 + $0x38] sm:$0xff]
    %v46 = vld [vmem:[%s1] sm:$0xff]
    %v47 = vld [vmem:[%s1 + $0x8] sm:$0xf]
    %v48 = vld [vmem:[%s3] sm:$0x7]
    %v50 = vlaneseq
    %v51 = vshrl.u32 %v50, 7
    %v52 = vsub.s32 0, %v51
    %v53 = vrot.slane %v48, %v52
    %v54 = vlaneseq
    %v55 = vshrl.u32 %v54, 7
    %v56 = vsub.s32 1, %v55
    %v57 = vrot.slane %v48, %v56
    %v58 = vlaneseq
    %v59 = vshrl.u32 %v58, 7
    %v60 = vsub.s32 2, %v59
    %v61 = vrot.slane %v48, %v60
    %v67 = vcombine.high %v46, %v46
    %vm68 = vcmask 31744
    %v70 = vsel %vm68, %v38, 0
    %v73 = vsel %vm68, %v39, 0
    %v76 = vsel %vm68, %v40, 0
    %v79 = vsel %vm68, %v41, 0
    %v82 = vsel %vm68, %v42, 0
    %v85 = vsel %vm68, %v43, 0
    %v88 = vsel %vm68, %v44, 0
    %v91 = vsel %vm68, %v45, 0
    %vm93 = vcmask 1043456
    %v94 = vsel %vm93, %v46, 0
    %v96 = vsel %vm93, %v67, 0
    %v98 = vsel %vm93, %v47, 0
    %100 = vmatprep.subr.mxu0 %v96
    %101 = vmatpush1.msra.mxu0 %v94
    %102 = vmatprep.subr.mxu0 0.0
    %103 = vmatpush1.msra.mxu0 0.0
    %104 = vmatprep.subr.mxu0 0.0
    %105 = vmatpush1.msra.mxu0 0.0
    %106 = vmatprep.subr.mxu0 0.0
    %107 = vmatpush1.msra.mxu0 0.0
    %108 = vmatprep.subr.mxu0 0.0
    %109 = vmatpush1.msra.mxu0 0.0
    %110 = vmatprep.subr.mxu0 0.0
    %111 = vmatpush1.msra.mxu0 0.0
    %112 = vmatprep.subr.mxu0 0.0
    %113 = vmatpush1.msra.mxu0 0.0
    %114 = vmatprep.subr.mxu0 0.0
    %115 = vmatpush1.msra.mxu0 0.0
    %116 = vmatprep.subr.mxu0 0.0
    %117 = vmatpush1.msra.mxu0 0.0
    %118 = vmatprep.subr.mxu0 0.0
    %119 = vmatpush1.msra.mxu0 0.0
    %120 = vmatprep.subr.mxu0 0.0
    %121 = vmatpush1.msra.mxu0 0.0
    %122 = vmatprep.subr.mxu0 0.0
    %123 = vmatpush1.msra.mxu0 0.0
    %124 = vmatprep.subr.mxu0 0.0
    %125 = vmatpush1.msra.mxu0 0.0
    %126 = vmatprep.subr.mxu0 0.0
    %127 = vmatpush1.msra.mxu0 0.0
    %128 = vmatprep.subr.mxu0 0.0
    %129 = vmatpush1.msra.mxu0 0.0
    %130 = vmatprep.subr.mxu0 0.0
    %131 = vmatpush1.msra.mxu0 0.0
    %132 = vmatprep.subr.mxu0 0.0
    %133 = vmatpush1.msra.mxu0 0.0
    %134 = vmatprep.subr.mxu0 0.0
    %135 = vmatpush1.msra.mxu0 0.0
    %136 = vmatprep.subr.mxu0 0.0
    %137 = vmatpush1.msra.mxu0 0.0
    %138 = vmatprep.subr.mxu0 0.0
    %139 = vmatpush1.msra.mxu0 0.0
    %140 = vmatprep.subr.mxu0 0.0
    %141 = vmatpush1.msra.mxu0 0.0
    %142 = vmatprep.subr.mxu0 0.0
    %143 = vmatpush1.msra.mxu0 0.0
    %144 = vmatprep.subr.mxu0 0.0
    %145 = vmatpush1.msra.mxu0 0.0
    %146 = vmatprep.subr.mxu0 0.0
    %147 = vmatpush1.msra.mxu0 0.0
    %148 = vmatprep.subr.mxu0 0.0
    %149 = vmatpush1.msra.mxu0 0.0
    %150 = vmatprep.subr.mxu0 0.0
    %151 = vmatpush1.msra.mxu0 0.0
    %152 = vmatprep.subr.mxu0 0.0
    %153 = vmatpush1.msra.mxu0 0.0
    %154 = vmatprep.subr.mxu0 0.0
    %155 = vmatpush1.msra.mxu0 0.0
    %156 = vmatprep.subr.mxu0 0.0
    %157 = vmatpush1.msra.mxu0 0.0
    %158 = vmatprep.subr.mxu0 0.0
    %159 = vmatpush1.msra.mxu0 0.0
    %160 = vmatprep.subr.mxu0 0.0
    %161 = vmatpush1.msra.mxu0 0.0
    %162 = vmatprep.subr.mxu0 0.0
    %163 = vmatpush1.msra.mxu0 0.0
    %164 = vmatprep.mubr.f32.mxu0 0.0
    %165 = vmatmul.mubr.f32.gmra.mrb[0].mxu0 %v70
    %v166 = vpop.f32.mrb[0].mxu0
    %v167 = vadd.f32 %v53, %v166
    %v168 = vpop.f32.mrb[0].mxu0
    %v169 = vadd.f32 %v57, %v168
    %170 = vmatprep.mubr.f32.mxu0 0.0
    %171 = vmatmul.mubr.f32.gmra.mrb[0].mxu0 %v73
    %v172 = vpop.f32.mrb[0].mxu0
    %v173 = vadd.f32 %v53, %v172
    %v174 = vpop.f32.mrb[0].mxu0
    %v175 = vadd.f32 %v57, %v174
    %176 = vmatprep.mubr.f32.mxu0 0.0
    %177 = vmatmul.mubr.f32.gmra.mrb[0].mxu0 %v76
    %v178 = vpop.f32.mrb[0].mxu0
    %v179 = vadd.f32 %v53, %v178
    %v180 = vpop.f32.mrb[0].mxu0
    %v181 = vadd.f32 %v57, %v180
    %182 = vmatprep.mubr.f32.mxu0 0.0
    %183 = vmatmul.mubr.f32.gmra.mrb[0].mxu0 %v79
    %v184 = vpop.f32.mrb[0].mxu0
    %v185 = vadd.f32 %v53, %v184
    %v186 = vpop.f32.mrb[0].mxu0
    %v187 = vadd.f32 %v57, %v186
    %188 = vmatprep.mubr.f32.mxu0 0.0
    %189 = vmatmul.mubr.f32.gmra.mrb[0].mxu0 %v82
    %v190 = vpop.f32.mrb[0].mxu0
    %v191 = vadd.f32 %v53, %v190
    %v192 = vpop.f32.mrb[0].mxu0
    %v193 = vadd.f32 %v57, %v192
    %194 = vmatprep.mubr.f32.mxu0 0.0
    %195 = vmatmul.mubr.f32.gmra.mrb[0].mxu0 %v85
    %v196 = vpop.f32.mrb[0].mxu0
    %v197 = vadd.f32 %v53, %v196
    %v198 = vpop.f32.mrb[0].mxu0
    %v199 = vadd.f32 %v57, %v198
    %200 = vmatprep.mubr.f32.mxu0 0.0
    %201 = vmatmul.mubr.f32.gmra.mrb[0].mxu0 %v88
    %v202 = vpop.f32.mrb[0].mxu0
    %v203 = vadd.f32 %v53, %v202
    %v204 = vpop.f32.mrb[0].mxu0
    %v205 = vadd.f32 %v57, %v204
    %206 = vmatprep.mubr.f32.mxu0 0.0
    %207 = vmatmul.mubr.f32.gmra.mrb[0].mxu0 %v91
    %v208 = vpop.f32.mrb[0].mxu0
    %v209 = vadd.f32 %v53, %v208
    %v210 = vpop.f32.mrb[0].mxu0
    %v211 = vadd.f32 %v57, %v210
    %212 = vdwg.mxu0
    %213 = vmatprep.subr.mxu0 0.0
    %214 = vmatpush1.msra.mxu0 %v98
    %215 = vmatprep.subr.mxu0 0.0
    %216 = vmatpush1.msra.mxu0 0.0
    %217 = vmatprep.subr.mxu0 0.0
    %218 = vmatpush1.msra.mxu0 0.0
    %219 = vmatprep.subr.mxu0 0.0
    %220 = vmatpush1.msra.mxu0 0.0
    %221 = vmatprep.subr.mxu0 0.0
    %222 = vmatpush1.msra.mxu0 0.0
    %223 = vmatprep.subr.mxu0 0.0
    %224 = vmatpush1.msra.mxu0 0.0
    %225 = vmatprep.subr.mxu0 0.0
    %226 = vmatpush1.msra.mxu0 0.0
    %227 = vmatprep.subr.mxu0 0.0
    %228 = vmatpush1.msra.mxu0 0.0
    %229 = vmatprep.subr.mxu0 0.0
    %230 = vmatpush1.msra.mxu0 0.0
    %231 = vmatprep.subr.mxu0 0.0
    %232 = vmatpush1.msra.mxu0 0.0
    %233 = vmatprep.subr.mxu0 0.0
    %234 = vmatpush1.msra.mxu0 0.0
    %235 = vmatprep.subr.mxu0 0.0
    %236 = vmatpush1.msra.mxu0 0.0
    %237 = vmatprep.subr.mxu0 0.0
    %238 = vmatpush1.msra.mxu0 0.0
    %239 = vmatprep.subr.mxu0 0.0
    %240 = vmatpush1.msra.mxu0 0.0
    %241 = vmatprep.subr.mxu0 0.0
    %242 = vmatpush1.msra.mxu0 0.0
    %243 = vmatprep.subr.mxu0 0.0
    %244 = vmatpush1.msra.mxu0 0.0
    %245 = vmatprep.subr.mxu0 0.0
    %246 = vmatpush1.msra.mxu0 0.0
    %247 = vmatprep.subr.mxu0 0.0
    %248 = vmatpush1.msra.mxu0 0.0
    %249 = vmatprep.subr.mxu0 0.0
    %250 = vmatpush1.msra.mxu0 0.0
    %251 = vmatprep.subr.mxu0 0.0
    %252 = vmatpush1.msra.mxu0 0.0
    %253 = vmatprep.subr.mxu0 0.0
    %254 = vmatpush1.msra.mxu0 0.0
    %255 = vmatprep.subr.mxu0 0.0
    %256 = vmatpush1.msra.mxu0 0.0
    %257 = vmatprep.subr.mxu0 0.0
    %258 = vmatpush1.msra.mxu0 0.0
    %259 = vmatprep.subr.mxu0 0.0
    %260 = vmatpush1.msra.mxu0 0.0
    %261 = vmatprep.subr.mxu0 0.0
    %262 = vmatpush1.msra.mxu0 0.0
    %263 = vmatprep.subr.mxu0 0.0
    %264 = vmatpush1.msra.mxu0 0.0
    %265 = vmatprep.subr.mxu0 0.0
    %266 = vmatpush1.msra.mxu0 0.0
    %267 = vmatprep.subr.mxu0 0.0
    %268 = vmatpush1.msra.mxu0 0.0
    %269 = vmatprep.subr.mxu0 0.0
    %270 = vmatpush1.msra.mxu0 0.0
    %271 = vmatprep.subr.mxu0 0.0
    %272 = vmatpush1.msra.mxu0 0.0
    %273 = vmatprep.subr.mxu0 0.0
    %274 = vmatpush1.msra.mxu0 0.0
    %275 = vmatprep.subr.mxu0 0.0
    %276 = vmatpush1.msra.mxu0 0.0
    %277 = vmatprep.mubr.f32.mxu0 0.0
    %278 = vmatmul.mubr.f32.gmra.mrb[0].mxu0 %v70
    %v279 = vpop.f32.mrb[0].mxu0
    %v280 = vadd.f32 %v61, %v279
    %v281 = vpop.f32.mrb[0].mxu0
    %282 = vmatprep.mubr.f32.mxu0 0.0
    %283 = vmatmul.mubr.f32.gmra.mrb[0].mxu0 %v73
    %v284 = vpop.f32.mrb[0].mxu0
    %v285 = vadd.f32 %v61, %v284
    %v286 = vpop.f32.mrb[0].mxu0
    %287 = vmatprep.mubr.f32.mxu0 0.0
    %288 = vmatmul.mubr.f32.gmra.mrb[0].mxu0 %v76
    %v289 = vpop.f32.mrb[0].mxu0
    %v290 = vadd.f32 %v61, %v289
    %v291 = vpop.f32.mrb[0].mxu0
    %292 = vmatprep.mubr.f32.mxu0 0.0
    %293 = vmatmul.mubr.f32.gmra.mrb[0].mxu0 %v79
    %v294 = vpop.f32.mrb[0].mxu0
    %v295 = vadd.f32 %v61, %v294
    %v296 = vpop.f32.mrb[0].mxu0
    %297 = vmatprep.mubr.f32.mxu0 0.0
    %298 = vmatmul.mubr.f32.gmra.mrb[0].mxu0 %v82
    %v299 = vpop.f32.mrb[0].mxu0
    %v300 = vadd.f32 %v61, %v299
    %v301 = vpop.f32.mrb[0].mxu0
    %302 = vmatprep.mubr.f32.mxu0 0.0
    %303 = vmatmul.mubr.f32.gmra.mrb[0].mxu0 %v85
    %v304 = vpop.f32.mrb[0].mxu0
    %v305 = vadd.f32 %v61, %v304
    %v306 = vpop.f32.mrb[0].mxu0
    %307 = vmatprep.mubr.f32.mxu0 0.0
    %308 = vmatmul.mubr.f32.gmra.mrb[0].mxu0 %v88
    %v309 = vpop.f32.mrb[0].mxu0
    %v310 = vadd.f32 %v61, %v309
    %v311 = vpop.f32.mrb[0].mxu0
    %312 = vmatprep.mubr.f32.mxu0 0.0
    %313 = vmatmul.mubr.f32.gmra.mrb[0].mxu0 %v91
    %v314 = vpop.f32.mrb[0].mxu0
    %v315 = vadd.f32 %v61, %v314
    %v316 = vpop.f32.mrb[0].mxu0
    %317 = vdwg.mxu0
    %318 = vst [vmem:[#allocation2] sm:$0xff] %v167
    %319 = vst [vmem:[#allocation2 + $0x8] sm:$0xff] %v169
    %320 = vst [vmem:[#allocation2 + $0x10] sm:$0xff] %v280
    %321 = vst [vmem:[#allocation2 + $0x18] sm:$0xff] %v173
    %322 = vst [vmem:[#allocation2 + $0x20] sm:$0xff] %v175
    %323 = vst [vmem:[#allocation2 + $0x28] sm:$0xff] %v285
    %324 = vst [vmem:[#allocation2 + $0x30] sm:$0xff] %v179
    %325 = vst [vmem:[#allocation2 + $0x38] sm:$0xff] %v181
    %326 = vst [vmem:[#allocation2 + $0x40] sm:$0xff] %v290
    %327 = vst [vmem:[#allocation2 + $0x48] sm:$0xff] %v185
    %328 = vst [vmem:[#allocation2 + $0x50] sm:$0xff] %v187
    %329 = vst [vmem:[#allocation2 + $0x58] sm:$0xff] %v295
    %330 = vst [vmem:[#allocation2 + $0x60] sm:$0xff] %v191
    %331 = vst [vmem:[#allocation2 + $0x68] sm:$0xff] %v193
    %332 = vst [vmem:[#allocation2 + $0x70] sm:$0xff] %v300
    %333 = vst [vmem:[#allocation2 + $0x78] sm:$0xff] %v197
    %334 = vst [vmem:[#allocation2 + $0x80] sm:$0xff] %v199
    %335 = vst [vmem:[#allocation2 + $0x88] sm:$0xff] %v305
    %336 = vst [vmem:[#allocation2 + $0x90] sm:$0xff] %v203
    %337 = vst [vmem:[#allocation2 + $0x98] sm:$0xff] %v205
    %338 = vst [vmem:[#allocation2 + $0xa0] sm:$0xff] %v310
    %339 = vst [vmem:[#allocation2 + $0xa8] sm:$0xff] %v209
    %340 = vst [vmem:[#allocation2 + $0xb0] sm:$0xff] %v211
    %341 = vst [vmem:[#allocation2 + $0xb8] sm:$0xff] %v315
    %v342 = vld [vmem:[#allocation3] sm:$0xff]
    %v343 = vld [vmem:[#allocation3 + $0x8] sm:$0xff]
    %v344 = vld [vmem:[#allocation3 + $0x10] sm:$0xff]
    %v345 = vld [vmem:[#allocation3 + $0x18] sm:$0xff]
    %v346 = vld [vmem:[#allocation3 + $0x20] sm:$0xff]
    %v347 = vld [vmem:[#allocation3 + $0x28] sm:$0xff]
    %v348 = vld [vmem:[#allocation3 + $0x30] sm:$0xff]
    %v349 = vld [vmem:[#allocation3 + $0x38] sm:$0xff]
    %v350 = vld [vmem:[#allocation3 + $0x40] sm:$0xff]
    %v351 = vld [vmem:[#allocation3 + $0x48] sm:$0xff]
    %v352 = vld [vmem:[#allocation3 + $0x50] sm:$0xff]
    %v353 = vld [vmem:[#allocation3 + $0x58] sm:$0xff]
    %v354 = vld [vmem:[#allocation3 + $0x60] sm:$0xff]
    %v355 = vld [vmem:[#allocation3 + $0x68] sm:$0xff]
    %v356 = vld [vmem:[#allocation3 + $0x70] sm:$0xff]
    %v357 = vld [vmem:[#allocation3 + $0x78] sm:$0xff]
    %v358 = vld [vmem:[#allocation3 + $0x80] sm:$0xff]
    %v359 = vld [vmem:[#allocation3 + $0x88] sm:$0xff]
    %v360 = vld [vmem:[#allocation3 + $0x90] sm:$0xff]
    %v361 = vld [vmem:[#allocation3 + $0x98] sm:$0xff]
    %v362 = vld [vmem:[#allocation3 + $0xa0] sm:$0xff]
    %v363 = vld [vmem:[#allocation3 + $0xa8] sm:$0xff]
    %v364 = vld [vmem:[#allocation3 + $0xb0] sm:$0xff]
    %v365 = vld [vmem:[#allocation3 + $0xb8] sm:$0xff]
    %v366 = vld [vmem:[#allocation3 + $0xc0] sm:$0xff]
    %v367 = vld [vmem:[#allocation3 + $0xc8] sm:$0xff]
    %v368 = vld [vmem:[#allocation3 + $0xd0] sm:$0xff]
    %v369 = vld [vmem:[#allocation3 + $0xd8] sm:$0xff]
    %v370 = vld [vmem:[#allocation3 + $0xe0] sm:$0xff]
    %v371 = vld [vmem:[#allocation3 + $0xe8] sm:$0xff]
    %v372 = vld [vmem:[#allocation3 + $0xf0] sm:$0xff]
    %v373 = vld [vmem:[#allocation3 + $0xf8] sm:$0xff]
    %v374 = vld [vmem:[#allocation3 + $0x100] sm:$0xff]
    %v375 = vld [vmem:[#allocation3 + $0x108] sm:$0xff]
    %v376 = vld [vmem:[#allocation3 + $0x110] sm:$0xff]
    %v377 = vld [vmem:[#allocation3 + $0x118] sm:$0xff]
    %v378 = vld [vmem:[#allocation3 + $0x120] sm:$0xff]
    %v379 = vld [vmem:[#allocation3 + $0x128] sm:$0xff]
    %v380 = vld [vmem:[#allocation3 + $0x130] sm:$0xff]
    %v381 = vld [vmem:[#allocation3 + $0x138] sm:$0xff]
    %v382 = vld [vmem:[#allocation3 + $0x140] sm:$0xff]
    %v383 = vld [vmem:[#allocation3 + $0x148] sm:$0xff]
    %v384 = vld [vmem:[#allocation3 + $0x150] sm:$0xff]
    %v385 = vld [vmem:[#allocation3 + $0x158] sm:$0xff]
    %v386 = vld [vmem:[#allocation3 + $0x160] sm:$0xff]
    %v387 = vld [vmem:[#allocation3 + $0x168] sm:$0xff]
    %v388 = vld [vmem:[#allocation3 + $0x170] sm:$0xff]
    %v389 = vld [vmem:[#allocation3 + $0x178] sm:$0xff]
    %v390 = vld [vmem:[%s4] sm:$0x1]
    %v392 = vlaneseq
    %v393 = vshrl.u32 %v392, 7
    %v394 = vsub.s32 0, %v393
    %v395 = vrot.slane %v390, %v394
    %v397 = vld [vmem:[#allocation2] sm:$0xff]
    %v398 = vld [vmem:[#allocation2 + $0x8] sm:$0xff]
    %v399 = vld [vmem:[#allocation2 + $0x10] sm:$0xff]
    %400 = vmatprep.subr.mxu0 %v343
    %401 = vmatpush1.msra.mxu0 %v342
    %402 = vmatprep.subr.mxu0 %v346
    %403 = vmatpush1.msra.mxu0 %v345
    %404 = vmatprep.subr.mxu0 %v349
    %405 = vmatpush1.msra.mxu0 %v348
    %406 = vmatprep.subr.mxu0 %v352
    %407 = vmatpush1.msra.mxu0 %v351
    %408 = vmatprep.subr.mxu0 %v355
    %409 = vmatpush1.msra.mxu0 %v354
    %410 = vmatprep.subr.mxu0 %v358
    %411 = vmatpush1.msra.mxu0 %v357
    %412 = vmatprep.subr.mxu0 %v361
    %413 = vmatpush1.msra.mxu0 %v360
    %414 = vmatprep.subr.mxu0 %v364
    %415 = vmatpush1.msra.mxu0 %v363
    %416 = vmatprep.subr.mxu0 %v367
    %417 = vmatpush1.msra.mxu0 %v366
    %418 = vmatprep.subr.mxu0 %v370
    %419 = vmatpush1.msra.mxu0 %v369
    %420 = vmatprep.subr.mxu0 %v373
    %421 = vmatpush1.msra.mxu0 %v372
    %422 = vmatprep.subr.mxu0 %v376
    %423 = vmatpush1.msra.mxu0 %v375
    %424 = vmatprep.subr.mxu0 %v379
    %425 = vmatpush1.msra.mxu0 %v378
    %426 = vmatprep.subr.mxu0 %v382
    %427 = vmatpush1.msra.mxu0 %v381
    %428 = vmatprep.subr.mxu0 %v385
    %429 = vmatpush1.msra.mxu0 %v384
    %430 = vmatprep.subr.mxu0 %v388
    %431 = vmatpush1.msra.mxu0 %v387
    %432 = vmatprep.subr.mxu0 0.0
    %433 = vmatpush1.msra.mxu0 0.0
    %434 = vmatprep.subr.mxu0 0.0
    %435 = vmatpush1.msra.mxu0 0.0
    %436 = vmatprep.subr.mxu0 0.0
    %437 = vmatpush1.msra.mxu0 0.0
    %438 = vmatprep.subr.mxu0 0.0
    %439 = vmatpush1.msra.mxu0 0.0
    %440 = vmatprep.subr.mxu0 0.0
    %441 = vmatpush1.msra.mxu0 0.0
    %442 = vmatprep.subr.mxu0 0.0
    %443 = vmatpush1.msra.mxu0 0.0
    %444 = vmatprep.subr.mxu0 0.0
    %445 = vmatpush1.msra.mxu0 0.0
    %446 = vmatprep.subr.mxu0 0.0
    %447 = vmatpush1.msra.mxu0 0.0
    %448 = vmatprep.subr.mxu0 0.0
    %449 = vmatpush1.msra.mxu0 0.0
    %450 = vmatprep.subr.mxu0 0.0
    %451 = vmatpush1.msra.mxu0 0.0
    %452 = vmatprep.subr.mxu0 0.0
    %453 = vmatpush1.msra.mxu0 0.0
    %454 = vmatprep.subr.mxu0 0.0
    %455 = vmatpush1.msra.mxu0 0.0
    %456 = vmatprep.subr.mxu0 0.0
    %457 = vmatpush1.msra.mxu0 0.0
    %458 = vmatprep.subr.mxu0 0.0
    %459 = vmatpush1.msra.mxu0 0.0
    %460 = vmatprep.subr.mxu0 0.0
    %461 = vmatpush1.msra.mxu0 0.0
    %462 = vmatprep.subr.mxu0 0.0
    %463 = vmatpush1.msra.mxu0 0.0
    %464 = vmatprep.mubr.f32.mxu0 0.0
    %465 = vmatmul.mubr.f32.gmra.mrb[0].mxu0 0.0
    %v466 = vpop.f32.mrb[0].mxu0
    %v467 = vadd.f32 0.0, %v466
    %v468 = vpop.f32.mrb[0].mxu0
    %v469 = vadd.f32 0.0, %v468
    %470 = vdwg.mxu0
    %471 = vmatprep.subr.mxu0 0.0
    %472 = vmatpush1.msra.mxu0 %v344
    %473 = vmatprep.subr.mxu0 0.0
    %474 = vmatpush1.msra.mxu0 %v347
    %475 = vmatprep.subr.mxu0 0.0
    %476 = vmatpush1.msra.mxu0 %v350
    %477 = vmatprep.subr.mxu0 0.0
    %478 = vmatpush1.msra.mxu0 %v353
    %479 = vmatprep.subr.mxu0 0.0
    %480 = vmatpush1.msra.mxu0 %v356
    %481 = vmatprep.subr.mxu0 0.0
    %482 = vmatpush1.msra.mxu0 %v359
    %483 = vmatprep.subr.mxu0 0.0
    %484 = vmatpush1.msra.mxu0 %v362
    %485 = vmatprep.subr.mxu0 0.0
    %486 = vmatpush1.msra.mxu0 %v365
    %487 = vmatprep.subr.mxu0 0.0
    %488 = vmatpush1.msra.mxu0 %v368
    %489 = vmatprep.subr.mxu0 0.0
    %490 = vmatpush1.msra.mxu0 %v371
    %491 = vmatprep.subr.mxu0 0.0
    %492 = vmatpush1.msra.mxu0 %v374
    %493 = vmatprep.subr.mxu0 0.0
    %494 = vmatpush1.msra.mxu0 %v377
    %495 = vmatprep.subr.mxu0 0.0
    %496 = vmatpush1.msra.mxu0 %v380
    %497 = vmatprep.subr.mxu0 0.0
    %498 = vmatpush1.msra.mxu0 %v383
    %499 = vmatprep.subr.mxu0 0.0
    %500 = vmatpush1.msra.mxu0 %v386
    %501 = vmatprep.subr.mxu0 0.0
    %502 = vmatpush1.msra.mxu0 %v389
    %503 = vmatprep.subr.mxu0 0.0
    %504 = vmatpush1.msra.mxu0 0.0
    %505 = vmatprep.subr.mxu0 0.0
    %506 = vmatpush1.msra.mxu0 0.0
    %507 = vmatprep.subr.mxu0 0.0
    %508 = vmatpush1.msra.mxu0 0.0
    %509 = vmatprep.subr.mxu0 0.0
    %510 = vmatpush1.msra.mxu0 0.0
    %511 = vmatprep.subr.mxu0 0.0
    %512 = vmatpush1.msra.mxu0 0.0
    %513 = vmatprep.subr.mxu0 0.0
    %514 = vmatpush1.msra.mxu0 0.0
    %515 = vmatprep.subr.mxu0 0.0
    %516 = vmatpush1.msra.mxu0 0.0
    %517 = vmatprep.subr.mxu0 0.0
    %518 = vmatpush1.msra.mxu0 0.0
    %519 = vmatprep.subr.mxu0 0.0
    %520 = vmatpush1.msra.mxu0 0.0
    %521 = vmatprep.subr.mxu0 0.0
    %522 = vmatpush1.msra.mxu0 0.0
    %523 = vmatprep.subr.mxu0 0.0
    %524 = vmatpush1.msra.mxu0 0.0
    %525 = vmatprep.subr.mxu0 0.0
    %526 = vmatpush1.msra.mxu0 0.0
    %527 = vmatprep.subr.mxu0 0.0
    %528 = vmatpush1.msra.mxu0 0.0
    %529 = vmatprep.subr.mxu0 0.0
    %530 = vmatpush1.msra.mxu0 0.0
    %531 = vmatprep.subr.mxu0 0.0
    %532 = vmatpush1.msra.mxu0 0.0
    %533 = vmatprep.subr.mxu0 0.0
    %534 = vmatpush1.msra.mxu0 0.0
    %535 = vmatprep.mubr.f32.mxu0 0.0
    %536 = vmatmul.mubr.f32.gmra.mrb[0].mxu0 0.0
    %v537 = vpop.f32.mrb[0].mxu0
    %v538 = vadd.f32 0.0, %v537
    %v539 = vpop.f32.mrb[0].mxu0
    %540 = vdwg.mxu0
    %v541 = vadd.f32 %v397, %v467
    %v542 = vxor.u32 %v541, 2147483648
    %v543 = vmul.f32 %v542, 1.442695
    %v544 = vpow.pop %v543
    %v545 = vadd.f32 %v544, 1.0
    %v546 = vrcp.pop %v545
    %v547 = vmul.f32 1.0, %v546
    %v548 = vadd.f32 %v398, %v469
    %v549 = vxor.u32 %v548, 2147483648
    %v550 = vmul.f32 %v549, 1.442695
    %v551 = vpow.pop %v550
    %v552 = vadd.f32 %v551, 1.0
    %v553 = vrcp.pop %v552
    %v554 = vmul.f32 1.0, %v553
    %v555 = vadd.f32 %v538, %v395
    %v556 = vmul.f32 %v547, %v555
    %v557 = vadd.f32 %v399, %v556
    %v558 = vtanh.pop %v557
    %v559 = vsub.f32 1.0, %v554
    %v560 = vmul.f32 %v559, %v558
    %v561 = vmul.f32 %v554, 0.0
    %v562 = vadd.f32 %v560, %v561
    %563 = vst [vmem:[#allocation6] sm:$0xff] %v562
    %v564 = vld [vmem:[#allocation2 + $0x18] sm:$0xff]
    %v565 = vld [vmem:[#allocation2 + $0x20] sm:$0xff]
    %v566 = vld [vmem:[#allocation2 + $0x28] sm:$0xff]
    %567 = vmatprep.subr.mxu0 %v343
    %568 = vmatpush1.msra.mxu0 %v342
    %569 = vmatprep.subr.mxu0 %v346
    %570 = vmatpush1.msra.mxu0 %v345
    %571 = vmatprep.subr.mxu0 %v349
    %572 = vmatpush1.msra.mxu0 %v348
    %573 = vmatprep.subr.mxu0 %v352
    %574 = vmatpush1.msra.mxu0 %v351
    %575 = vmatprep.subr.mxu0 %v355
    %576 = vmatpush1.msra.mxu0 %v354
    %577 = vmatprep.subr.mxu0 %v358
    %578 = vmatpush1.msra.mxu0 %v357
    %579 = vmatprep.subr.mxu0 %v361
    %580 = vmatpush1.msra.mxu0 %v360
    %581 = vmatprep.subr.mxu0 %v364
    %582 = vmatpush1.msra.mxu0 %v363
    %583 = vmatprep.subr.mxu0 %v367
    %584 = vmatpush1.msra.mxu0 %v366
    %585 = vmatprep.subr.mxu0 %v370
    %586 = vmatpush1.msra.mxu0 %v369
    %587 = vmatprep.subr.mxu0 %v373
    %588 = vmatpush1.msra.mxu0 %v372
    %589 = vmatprep.subr.mxu0 %v376
    %590 = vmatpush1.msra.mxu0 %v375
    %591 = vmatprep.subr.mxu0 %v379
    %592 = vmatpush1.msra.mxu0 %v378
    %593 = vmatprep.subr.mxu0 %v382
    %594 = vmatpush1.msra.mxu0 %v381
    %595 = vmatprep.subr.mxu0 %v385
    %596 = vmatpush1.msra.mxu0 %v384
    %597 = vmatprep.subr.mxu0 %v388
    %598 = vmatpush1.msra.mxu0 %v387
    %599 = vmatprep.subr.mxu0 0.0
    %600 = vmatpush1.msra.mxu0 0.0
    %601 = vmatprep.subr.mxu0 0.0
    %602 = vmatpush1.msra.mxu0 0.0
    %603 = vmatprep.subr.mxu0 0.0
    %604 = vmatpush1.msra.mxu0 0.0
    %605 = vmatprep.subr.mxu0 0.0
    %606 = vmatpush1.msra.mxu0 0.0
    %607 = vmatprep.subr.mxu0 0.0
    %608 = vmatpush1.msra.mxu0 0.0
    %609 = vmatprep.subr.mxu0 0.0
    %610 = vmatpush1.msra.mxu0 0.0
    %611 = vmatprep.subr.mxu0 0.0
    %612 = vmatpush1.msra.mxu0 0.0
    %613 = vmatprep.subr.mxu0 0.0
    %614 = vmatpush1.msra.mxu0 0.0
    %615 = vmatprep.subr.mxu0 0.0
    %616 = vmatpush1.msra.mxu0 0.0
    %617 = vmatprep.subr.mxu0 0.0
    %618 = vmatpush1.msra.mxu0 0.0
    %619 = vmatprep.subr.mxu0 0.0
    %620 = vmatpush1.msra.mxu0 0.0
    %621 = vmatprep.subr.mxu0 0.0
    %622 = vmatpush1.msra.mxu0 0.0
    %623 = vmatprep.subr.mxu0 0.0
    %624 = vmatpush1.msra.mxu0 0.0
    %625 = vmatprep.subr.mxu0 0.0
    %626 = vmatpush1.msra.mxu0 0.0
    %627 = vmatprep.subr.mxu0 0.0
    %628 = vmatpush1.msra.mxu0 0.0
    %629 = vmatprep.subr.mxu0 0.0
    %630 = vmatpush1.msra.mxu0 0.0
    %631 = vmatprep.mubr.f32.mxu0 0.0
    %632 = vmatmul.mubr.f32.gmra.mrb[0].mxu0 %v562
    %v633 = vpop.f32.mrb[0].mxu0
    %v634 = vadd.f32 0.0, %v633
    %v635 = vpop.f32.mrb[0].mxu0
    %v636 = vadd.f32 0.0, %v635
    %637 = vdwg.mxu0
    %638 = vmatprep.subr.mxu0 0.0
    %639 = vmatpush1.msra.mxu0 %v344
    %640 = vmatprep.subr.mxu0 0.0
    %641 = vmatpush1.msra.mxu0 %v347
    %642 = vmatprep.subr.mxu0 0.0
    %643 = vmatpush1.msra.mxu0 %v350
    %644 = vmatprep.subr.mxu0 0.0
    %645 = vmatpush1.msra.mxu0 %v353
    %646 = vmatprep.subr.mxu0 0.0
    %647 = vmatpush1.msra.mxu0 %v356
    %648 = vmatprep.subr.mxu0 0.0
    %649 = vmatpush1.msra.mxu0 %v359
    %650 = vmatprep.subr.mxu0 0.0
    %651 = vmatpush1.msra.mxu0 %v362
    %652 = vmatprep.subr.mxu0 0.0
    %653 = vmatpush1.msra.mxu0 %v365
    %654 = vmatprep.subr.mxu0 0.0
    %655 = vmatpush1.msra.mxu0 %v368
    %656 = vmatprep.subr.mxu0 0.0
    %657 = vmatpush1.msra.mxu0 %v371
    %658 = vmatprep.subr.mxu0 0.0
    %659 = vmatpush1.msra.mxu0 %v374
    %660 = vmatprep.subr.mxu0 0.0
    %661 = vmatpush1.msra.mxu0 %v377
    %662 = vmatprep.subr.mxu0 0.0
    %663 = vmatpush1.msra.mxu0 %v380
    %664 = vmatprep.subr.mxu0 0.0
    %665 = vmatpush1.msra.mxu0 %v383
    %666 = vmatprep.subr.mxu0 0.0
    %667 = vmatpush1.msra.mxu0 %v386
    %668 = vmatprep.subr.mxu0 0.0
    %669 = vmatpush1.msra.mxu0 %v389
    %670 = vmatprep.subr.mxu0 0.0
    %671 = vmatpush1.msra.mxu0 0.0
    %672 = vmatprep.subr.mxu0 0.0
    %673 = vmatpush1.msra.mxu0 0.0
    %674 = vmatprep.subr.mxu0 0.0
    %675 = vmatpush1.msra.mxu0 0.0
    %676 = vmatprep.subr.mxu0 0.0
    %677 = vmatpush1.msra.mxu0 0.0
    %678 = vmatprep.subr.mxu0 0.0
    %679 = vmatpush1.msra.mxu0 0.0
    %680 = vmatprep.subr.mxu0 0.0
    %681 = vmatpush1.msra.mxu0 0.0
    %682 = vmatprep.subr.mxu0 0.0
    %683 = vmatpush1.msra.mxu0 0.0
    %684 = vmatprep.subr.mxu0 0.0
    %685 = vmatpush1.msra.mxu0 0.0
    %686 = vmatprep.subr.mxu0 0.0
    %687 = vmatpush1.msra.mxu0 0.0
    %688 = vmatprep.subr.mxu0 0.0
    %689 = vmatpush1.msra.mxu0 0.0
    %690 = vmatprep.subr.mxu0 0.0
    %691 = vmatpush1.msra.mxu0 0.0
    %692 = vmatprep.subr.mxu0 0.0
    %693 = vmatpush1.msra.mxu0 0.0
    %694 = vmatprep.subr.mxu0 0.0
    %695 = vmatpush1.msra.mxu0 0.0
    %696 = vmatprep.subr.mxu0 0.0
    %697 = vmatpush1.msra.mxu0 0.0
    %698 = vmatprep.subr.mxu0 0.0
    %699 = vmatpush1.msra.mxu0 0.0
    %700 = vmatprep.subr.mxu0 0.0
    %701 = vmatpush1.msra.mxu0 0.0
    %702 = vmatprep.mubr.f32.mxu0 0.0
    %703 = vmatmul.mubr.f32.gmra.mrb[0].mxu0 %v562
    %v704 = vpop.f32.mrb[0].mxu0
    %v705 = vadd.f32 0.0, %v704
    %v706 = vpop.f32.mrb[0].mxu0
    %707 = vdwg.mxu0
    %v708 = vadd.f32 %v564, %v634
    %v709 = vxor.u32 %v708, 2147483648
    %v710 = vmul.f32 %v709, 1.442695
    %v711 = vpow.pop %v710
    %v712 = vadd.f32 %v711, 1.0
    %v713 = vrcp.pop %v712
    %v714 = vmul.f32 1.0, %v713
    %v715 = vadd.f32 %v565, %v636
    %v716 = vxor.u32 %v715, 2147483648
    %v717 = vmul.f32 %v716, 1.442695
    %v718 = vpow.pop %v717
    %v719 = vadd.f32 %v718, 1.0
    %v720 = vrcp.pop %v719
    %v721 = vmul.f32 1.0, %v720
    %v722 = vadd.f32 %v705, %v395
    %v723 = vmul.f32 %v714, %v722
    %v724 = vadd.f32 %v566, %v723
    %v725 = vtanh.pop %v724
    %v726 = vsub.f32 1.0, %v721
    %v727 = vmul.f32 %v726, %v725
    %v728 = vmul.f32 %v721, %v562
    %v729 = vadd.f32 %v727, %v728
    %s730 = scalar_lea.vmem [#allocation6], 8
    %731 = vst [vmem:[%s730] sm:$0xff] %v729
    %v732 = vld [vmem:[#allocation2 + $0x30] sm:$0xff]
    %v733 = vld [vmem:[#allocation2 + $0x38] sm:$0xff]
    %v734 = vld [vmem:[#allocation2 + $0x40] sm:$0xff]
    %735 = vmatprep.subr.mxu0 %v343
    %736 = vmatpush1.msra.mxu0 %v342
    %737 = vmatprep.subr.mxu0 %v346
    %738 = vmatpush1.msra.mxu0 %v345
    %739 = vmatprep.subr.mxu0 %v349
    %740 = vmatpush1.msra.mxu0 %v348
    %741 = vmatprep.subr.mxu0 %v352
    %742 = vmatpush1.msra.mxu0 %v351
    %743 = vmatprep.subr.mxu0 %v355
    %744 = vmatpush1.msra.mxu0 %v354
    %745 = vmatprep.subr.mxu0 %v358
    %746 = vmatpush1.msra.mxu0 %v357
    %747 = vmatprep.subr.mxu0 %v361
    %748 = vmatpush1.msra.mxu0 %v360
    %749 = vmatprep.subr.mxu0 %v364
    %750 = vmatpush1.msra.mxu0 %v363
    %751 = vmatprep.subr.mxu0 %v367
    %752 = vmatpush1.msra.mxu0 %v366
    %753 = vmatprep.subr.mxu0 %v370
    %754 = vmatpush1.msra.mxu0 %v369
    %755 = vmatprep.subr.mxu0 %v373
    %756 = vmatpush1.msra.mxu0 %v372
    %757 = vmatprep.subr.mxu0 %v376
    %758 = vmatpush1.msra.mxu0 %v375
    %759 = vmatprep.subr.mxu0 %v379
    %760 = vmatpush1.msra.mxu0 %v378
    %761 = vmatprep.subr.mxu0 %v382
    %762 = vmatpush1.msra.mxu0 %v381
    %763 = vmatprep.subr.mxu0 %v385
    %764 = vmatpush1.msra.mxu0 %v384
    %765 = vmatprep.subr.mxu0 %v388
    %766 = vmatpush1.msra.mxu0 %v387
    %767 = vmatprep.subr.mxu0 0.0
    %768 = vmatpush1.msra.mxu0 0.0
    %769 = vmatprep.subr.mxu0 0.0
    %770 = vmatpush1.msra.mxu0 0.0
    %771 = vmatprep.subr.mxu0 0.0
    %772 = vmatpush1.msra.mxu0 0.0
    %773 = vmatprep.subr.mxu0 0.0
    %774 = vmatpush1.msra.mxu0 0.0
    %775 = vmatprep.subr.mxu0 0.0
    %776 = vmatpush1.msra.mxu0 0.0
    %777 = vmatprep.subr.mxu0 0.0
    %778 = vmatpush1.msra.mxu0 0.0
    %779 = vmatprep.subr.mxu0 0.0
    %780 = vmatpush1.msra.mxu0 0.0
    %781 = vmatprep.subr.mxu0 0.0
    %782 = vmatpush1.msra.mxu0 0.0
    %783 = vmatprep.subr.mxu0 0.0
    %784 = vmatpush1.msra.mxu0 0.0
    %785 = vmatprep.subr.mxu0 0.0
    %786 = vmatpush1.msra.mxu0 0.0
    %787 = vmatprep.subr.mxu0 0.0
    %788 = vmatpush1.msra.mxu0 0.0
    %789 = vmatprep.subr.mxu0 0.0
    %790 = vmatpush1.msra.mxu0 0.0
    %791 = vmatprep.subr.mxu0 0.0
    %792 = vmatpush1.msra.mxu0 0.0
    %793 = vmatprep.subr.mxu0 0.0
    %794 = vmatpush1.msra.mxu0 0.0
    %795 = vmatprep.subr.mxu0 0.0
    %796 = vmatpush1.msra.mxu0 0.0
    %797 = vmatprep.subr.mxu0 0.0
    %798 = vmatpush1.msra.mxu0 0.0
    %799 = vmatprep.mubr.f32.mxu0 0.0
    %800 = vmatmul.mubr.f32.gmra.mrb[0].mxu0 %v729
    %v801 = vpop.f32.mrb[0].mxu0
    %v802 = vadd.f32 0.0, %v801
    %v803 = vpop.f32.mrb[0].mxu0
    %v804 = vadd.f32 0.0, %v803
    %805 = vdwg.mxu0
    %806 = vmatprep.subr.mxu0 0.0
    %807 = vmatpush1.msra.mxu0 %v344
    %808 = vmatprep.subr.mxu0 0.0
    %809 = vmatpush1.msra.mxu0 %v347
    %810 = vmatprep.subr.mxu0 0.0
    %811 = vmatpush1.msra.mxu0 %v350
    %812 = vmatprep.subr.mxu0 0.0
    %813 = vmatpush1.msra.mxu0 %v353
    %814 = vmatprep.subr.mxu0 0.0
    %815 = vmatpush1.msra.mxu0 %v356
    %816 = vmatprep.subr.mxu0 0.0
    %817 = vmatpush1.msra.mxu0 %v359
    %818 = vmatprep.subr.mxu0 0.0
    %819 = vmatpush1.msra.mxu0 %v362
    %820 = vmatprep.subr.mxu0 0.0
    %821 = vmatpush1.msra.mxu0 %v365
    %822 = vmatprep.subr.mxu0 0.0
    %823 = vmatpush1.msra.mxu0 %v368
    %824 = vmatprep.subr.mxu0 0.0
    %825 = vmatpush1.msra.mxu0 %v371
    %826 = vmatprep.subr.mxu0 0.0
    %827 = vmatpush1.msra.mxu0 %v374
    %828 = vmatprep.subr.mxu0 0.0
    %829 = vmatpush1.msra.mxu0 %v377
    %830 = vmatprep.subr.mxu0 0.0
    %831 = vmatpush1.msra.mxu0 %v380
    %832 = vmatprep.subr.mxu0 0.0
    %833 = vmatpush1.msra.mxu0 %v383
    %834 = vmatprep.subr.mxu0 0.0
    %835 = vmatpush1.msra.mxu0 %v386
    %836 = vmatprep.subr.mxu0 0.0
    %837 = vmatpush1.msra.mxu0 %v389
    %838 = vmatprep.subr.mxu0 0.0
    %839 = vmatpush1.msra.mxu0 0.0
    %840 = vmatprep.subr.mxu0 0.0
    %841 = vmatpush1.msra.mxu0 0.0
    %842 = vmatprep.subr.mxu0 0.0
    %843 = vmatpush1.msra.mxu0 0.0
    %844 = vmatprep.subr.mxu0 0.0
    %845 = vmatpush1.msra.mxu0 0.0
    %846 = vmatprep.subr.mxu0 0.0
    %847 = vmatpush1.msra.mxu0 0.0
    %848 = vmatprep.subr.mxu0 0.0
    %849 = vmatpush1.msra.mxu0 0.0
    %850 = vmatprep.subr.mxu0 0.0
    %851 = vmatpush1.msra.mxu0 0.0
    %852 = vmatprep.subr.mxu0 0.0
    %853 = vmatpush1.msra.mxu0 0.0
    %854 = vmatprep.subr.mxu0 0.0
    %855 = vmatpush1.msra.mxu0 0.0
    %856 = vmatprep.subr.mxu0 0.0
    %857 = vmatpush1.msra.mxu0 0.0
    %858 = vmatprep.subr.mxu0 0.0
    %859 = vmatpush1.msra.mxu0 0.0
    %860 = vmatprep.subr.mxu0 0.0
    %861 = vmatpush1.msra.mxu0 0.0
    %862 = vmatprep.subr.mxu0 0.0
    %863 = vmatpush1.msra.mxu0 0.0
    %864 = vmatprep.subr.mxu0 0.0
    %865 = vmatpush1.msra.mxu0 0.0
    %866 = vmatprep.subr.mxu0 0.0
    %867 = vmatpush1.msra.mxu0 0.0
    %868 = vmatprep.subr.mxu0 0.0
    %869 = vmatpush1.msra.mxu0 0.0
    %870 = vmatprep.mubr.f32.mxu0 0.0
    %871 = vmatmul.mubr.f32.gmra.mrb[0].mxu0 %v729
    %v872 = vpop.f32.mrb[0].mxu0
    %v873 = vadd.f32 0.0, %v872
    %v874 = vpop.f32.mrb[0].mxu0
    %875 = vdwg.mxu0
    %v876 = vadd.f32 %v732, %v802
    %v877 = vxor.u32 %v876, 2147483648
    %v878 = vmul.f32 %v877, 1.442695
    %v879 = vpow.pop %v878
    %v880 = vadd.f32 %v879, 1.0
    %v881 = vrcp.pop %v880
    %v882 = vmul.f32 1.0, %v881
    %v883 = vadd.f32 %v733, %v804
    %v884 = vxor.u32 %v883, 2147483648
    %v885 = vmul.f32 %v884, 1.442695
    %v886 = vpow.pop %v885
    %v887 = vadd.f32 %v886, 1.0
    %v888 = vrcp.pop %v887
    %v889 = vmul.f32 1.0, %v888
    %v890 = vadd.f32 %v873, %v395
    %v891 = vmul.f32 %v882, %v890
    %v892 = vadd.f32 %v734, %v891
    %v893 = vtanh.pop %v892
    %v894 = vsub.f32 1.0, %v889
    %v895 = vmul.f32 %v894, %v893
    %v896 = vmul.f32 %v889, %v729
    %v897 = vadd.f32 %v895, %v896
    %s898 = scalar_lea.vmem [#allocation6], 16
    %899 = vst [vmem:[%s898] sm:$0xff] %v897
    %v900 = vld [vmem:[#allocation2 + $0x48] sm:$0xff]
    %v901 = vld [vmem:[#allocation2 + $0x50] sm:$0xff]
    %v902 = vld [vmem:[#allocation2 + $0x58] sm:$0xff]
    %903 = vmatprep.subr.mxu0 %v343
    %904 = vmatpush1.msra.mxu0 %v342
    %905 = vmatprep.subr.mxu0 %v346
    %906 = vmatpush1.msra.mxu0 %v345
    %907 = vmatprep.subr.mxu0 %v349
    %908 = vmatpush1.msra.mxu0 %v348
    %909 = vmatprep.subr.mxu0 %v352
    %910 = vmatpush1.msra.mxu0 %v351
    %911 = vmatprep.subr.mxu0 %v355
    %912 = vmatpush1.msra.mxu0 %v354
    %913 = vmatprep.subr.mxu0 %v358
    %914 = vmatpush1.msra.mxu0 %v357
    %915 = vmatprep.subr.mxu0 %v361
    %916 = vmatpush1.msra.mxu0 %v360
    %917 = vmatprep.subr.mxu0 %v364
    %918 = vmatpush1.msra.mxu0 %v363
    %919 = vmatprep.subr.mxu0 %v367
    %920 = vmatpush1.msra.mxu0 %v366
    %921 = vmatprep.subr.mxu0 %v370
    %922 = vmatpush1.msra.mxu0 %v369
    %923 = vmatprep.subr.mxu0 %v373
    %924 = vmatpush1.msra.mxu0 %v372
    %925 = vmatprep.subr.mxu0 %v376
    %926 = vmatpush1.msra.mxu0 %v375
    %927 = vmatprep.subr.mxu0 %v379
    %928 = vmatpush1.msra.mxu0 %v378
    %929 = vmatprep.subr.mxu0 %v382
    %930 = vmatpush1.msra.mxu0 %v381
    %931 = vmatprep.subr.mxu0 %v385
    %932 = vmatpush1.msra.mxu0 %v384
    %933 = vmatprep.subr.mxu0 %v388
    %934 = vmatpush1.msra.mxu0 %v387
    %935 = vmatprep.subr.mxu0 0.0
    %936 = vmatpush1.msra.mxu0 0.0
    %937 = vmatprep.subr.mxu0 0.0
    %938 = vmatpush1.msra.mxu0 0.0
    %939 = vmatprep.subr.mxu0 0.0
    %940 = vmatpush1.msra.mxu0 0.0
    %941 = vmatprep.subr.mxu0 0.0
    %942 = vmatpush1.msra.mxu0 0.0
    %943 = vmatprep.subr.mxu0 0.0
    %944 = vmatpush1.msra.mxu0 0.0
    %945 = vmatprep.subr.mxu0 0.0
    %946 = vmatpush1.msra.mxu0 0.0
    %947 = vmatprep.subr.mxu0 0.0
    %948 = vmatpush1.msra.mxu0 0.0
    %949 = vmatprep.subr.mxu0 0.0
    %950 = vmatpush1.msra.mxu0 0.0
    %951 = vmatprep.subr.mxu0 0.0
    %952 = vmatpush1.msra.mxu0 0.0
    %953 = vmatprep.subr.mxu0 0.0
    %954 = vmatpush1.msra.mxu0 0.0
    %955 = vmatprep.subr.mxu0 0.0
    %956 = vmatpush1.msra.mxu0 0.0
    %957 = vmatprep.subr.mxu0 0.0
    %958 = vmatpush1.msra.mxu0 0.0
    %959 = vmatprep.subr.mxu0 0.0
    %960 = vmatpush1.msra.mxu0 0.0
    %961 = vmatprep.subr.mxu0 0.0
    %962 = vmatpush1.msra.mxu0 0.0
    %963 = vmatprep.subr.mxu0 0.0
    %964 = vmatpush1.msra.mxu0 0.0
    %965 = vmatprep.subr.mxu0 0.0
    %966 = vmatpush1.msra.mxu0 0.0
    %967 = vmatprep.mubr.f32.mxu0 0.0
    %968 = vmatmul.mubr.f32.gmra.mrb[0].mxu0 %v897
    %v969 = vpop.f32.mrb[0].mxu0
    %v970 = vadd.f32 0.0, %v969
    %v971 = vpop.f32.mrb[0].mxu0
    %v972 = vadd.f32 0.0, %v971
    %973 = vdwg.mxu0
    %974 = vmatprep.subr.mxu0 0.0
    %975 = vmatpush1.msra.mxu0 %v344
    %976 = vmatprep.subr.mxu0 0.0
    %977 = vmatpush1.msra.mxu0 %v347
    %978 = vmatprep.subr.mxu0 0.0
    %979 = vmatpush1.msra.mxu0 %v350
    %980 = vmatprep.subr.mxu0 0.0
    %981 = vmatpush1.msra.mxu0 %v353
    %982 = vmatprep.subr.mxu0 0.0
    %983 = vmatpush1.msra.mxu0 %v356
    %984 = vmatprep.subr.mxu0 0.0
    %985 = vmatpush1.msra.mxu0 %v359
    %986 = vmatprep.subr.mxu0 0.0
    %987 = vmatpush1.msra.mxu0 %v362
    %988 = vmatprep.subr.mxu0 0.0
    %989 = vmatpush1.msra.mxu0 %v365
    %990 = vmatprep.subr.mxu0 0.0
    %991 = vmatpush1.msra.mxu0 %v368
    %992 = vmatprep.subr.mxu0 0.0
    %993 = vmatpush1.msra.mxu0 %v371
    %994 = vmatprep.subr.mxu0 0.0
    %995 = vmatpush1.msra.mxu0 %v374
    %996 = vmatprep.subr.mxu0 0.0
    %997 = vmatpush1.msra.mxu0 %v377
    %998 = vmatprep.subr.mxu0 0.0
    %999 = vmatpush1.msra.mxu0 %v380
    %1000 = vmatprep.subr.mxu0 0.0
    %1001 = vmatpush1.msra.mxu0 %v383
    %1002 = vmatprep.subr.mxu0 0.0
    %1003 = vmatpush1.msra.mxu0 %v386
    %1004 = vmatprep.subr.mxu0 0.0
    %1005 = vmatpush1.msra.mxu0 %v389
    %1006 = vmatprep.subr.mxu0 0.0
    %1007 = vmatpush1.msra.mxu0 0.0
    %1008 = vmatprep.subr.mxu0 0.0
    %1009 = vmatpush1.msra.mxu0 0.0
    %1010 = vmatprep.subr.mxu0 0.0
    %1011 = vmatpush1.msra.mxu0 0.0
    %1012 = vmatprep.subr.mxu0 0.0
    %1013 = vmatpush1.msra.mxu0 0.0
    %1014 = vmatprep.subr.mxu0 0.0
    %1015 = vmatpush1.msra.mxu0 0.0
    %1016 = vmatprep.subr.mxu0 0.0
    %1017 = vmatpush1.msra.mxu0 0.0
    %1018 = vmatprep.subr.mxu0 0.0
    %1019 = vmatpush1.msra.mxu0 0.0
    %1020 = vmatprep.subr.mxu0 0.0
    %1021 = vmatpush1.msra.mxu0 0.0
    %1022 = vmatprep.subr.mxu0 0.0
    %1023 = vmatpush1.msra.mxu0 0.0
    %1024 = vmatprep.subr.mxu0 0.0
    %1025 = vmatpush1.msra.mxu0 0.0
    %1026 = vmatprep.subr.mxu0 0.0
    %1027 = vmatpush1.msra.mxu0 0.0
    %1028 = vmatprep.subr.mxu0 0.0
    %1029 = vmatpush1.msra.mxu0 0.0
    %1030 = vmatprep.subr.mxu0 0.0
    %1031 = vmatpush1.msra.mxu0 0.0
    %1032 = vmatprep.subr.mxu0 0.0
    %1033 = vmatpush1.msra.mxu0 0.0
    %1034 = vmatprep.subr.mxu0 0.0
    %1035 = vmatpush1.msra.mxu0 0.0
    %1036 = vmatprep.subr.mxu0 0.0
    %1037 = vmatpush1.msra.mxu0 0.0
    %1038 = vmatprep.mubr.f32.mxu0 0.0
    %1039 = vmatmul.mubr.f32.gmra.mrb[0].mxu0 %v897
    %v1040 = vpop.f32.mrb[0].mxu0
    %v1041 = vadd.f32 0.0, %v1040
    %v1042 = vpop.f32.mrb[0].mxu0
    %1043 = vdwg.mxu0
    %v1044 = vadd.f32 %v900, %v970
    %v1045 = vxor.u32 %v1044, 2147483648
    %v1046 = vmul.f32 %v1045, 1.442695
    %v1047 = vpow.pop %v1046
    %v1048 = vadd.f32 %v1047, 1.0
    %v1049 = vrcp.pop %v1048
    %v1050 = vmul.f32 1.0, %v1049
    %v1051 = vadd.f32 %v901, %v972
    %v1052 = vxor.u32 %v1051, 2147483648
    %v1053 = vmul.f32 %v1052, 1.442695
    %v1054 = vpow.pop %v1053
    %v1055 = vadd.f32 %v1054, 1.0
    %v1056 = vrcp.pop %v1055
    %v1057 = vmul.f32 1.0, %v1056
    %v1058 = vadd.f32 %v1041, %v395
    %v1059 = vmul.f32 %v1050, %v1058
    %v1060 = vadd.f32 %v902, %v1059
    %v1061 = vtanh.pop %v1060
    %v1062 = vsub.f32 1.0, %v1057
    %v1063 = vmul.f32 %v1062, %v1061
    %v1064 = vmul.f32 %v1057, %v897
    %v1065 = vadd.f32 %v1063, %v1064
    %s1066 = scalar_lea.vmem [#allocation6], 24
    %1067 = vst [vmem:[%s1066] sm:$0xff] %v1065
    %v1068 = vld [vmem:[#allocation2 + $0x60] sm:$0xff]
    %v1069 = vld [vmem:[#allocation2 + $0x68] sm:$0xff]
    %v1070 = vld [vmem:[#allocation2 + $0x70] sm:$0xff]
    %1071 = vmatprep.subr.mxu0 %v343
    %1072 = vmatpush1.msra.mxu0 %v342
    %1073 = vmatprep.subr.mxu0 %v346
    %1074 = vmatpush1.msra.mxu0 %v345
    %1075 = vmatprep.subr.mxu0 %v349
    %1076 = vmatpush1.msra.mxu0 %v348
    %1077 = vmatprep.subr.mxu0 %v352
    %1078 = vmatpush1.msra.mxu0 %v351
    %1079 = vmatprep.subr.mxu0 %v355
    %1080 = vmatpush1.msra.mxu0 %v354
    %1081 = vmatprep.subr.mxu0 %v358
    %1082 = vmatpush1.msra.mxu0 %v357
    %1083 = vmatprep.subr.mxu0 %v361
    %1084 = vmatpush1.msra.mxu0 %v360
    %1085 = vmatprep.subr.mxu0 %v364
    %1086 = vmatpush1.msra.mxu0 %v363
    %1087 = vmatprep.subr.mxu0 %v367
    %1088 = vmatpush1.msra.mxu0 %v366
    %1089 = vmatprep.subr.mxu0 %v370
    %1090 = vmatpush1.msra.mxu0 %v369
    %1091 = vmatprep.subr.mxu0 %v373
    %1092 = vmatpush1.msra.mxu0 %v372
    %1093 = vmatprep.subr.mxu0 %v376
    %1094 = vmatpush1.msra.mxu0 %v375
    %1095 = vmatprep.subr.mxu0 %v379
    %1096 = vmatpush1.msra.mxu0 %v378
    %1097 = vmatprep.subr.mxu0 %v382
    %1098 = vmatpush1.msra.mxu0 %v381
    %1099 = vmatprep.subr.mxu0 %v385
    %1100 = vmatpush1.msra.mxu0 %v384
    %1101 = vmatprep.subr.mxu0 %v388
    %1102 = vmatpush1.msra.mxu0 %v387
    %1103 = vmatprep.subr.mxu0 0.0
    %1104 = vmatpush1.msra.mxu0 0.0
    %1105 = vmatprep.subr.mxu0 0.0
    %1106 = vmatpush1.msra.mxu0 0.0
    %1107 = vmatprep.subr.mxu0 0.0
    %1108 = vmatpush1.msra.mxu0 0.0
    %1109 = vmatprep.subr.mxu0 0.0
    %1110 = vmatpush1.msra.mxu0 0.0
    %1111 = vmatprep.subr.mxu0 0.0
    %1112 = vmatpush1.msra.mxu0 0.0
    %1113 = vmatprep.subr.mxu0 0.0
    %1114 = vmatpush1.msra.mxu0 0.0
    %1115 = vmatprep.subr.mxu0 0.0
    %1116 = vmatpush1.msra.mxu0 0.0
    %1117 = vmatprep.subr.mxu0 0.0
    %1118 = vmatpush1.msra.mxu0 0.0
    %1119 = vmatprep.subr.mxu0 0.0
    %1120 = vmatpush1.msra.mxu0 0.0
    %1121 = vmatprep.subr.mxu0 0.0
    %1122 = vmatpush1.msra.mxu0 0.0
    %1123 = vmatprep.subr.mxu0 0.0
    %1124 = vmatpush1.msra.mxu0 0.0
    %1125 = vmatprep.subr.mxu0 0.0
    %1126 = vmatpush1.msra.mxu0 0.0
    %1127 = vmatprep.subr.mxu0 0.0
    %1128 = vmatpush1.msra.mxu0 0.0
    %1129 = vmatprep.subr.mxu0 0.0
    %1130 = vmatpush1.msra.mxu0 0.0
    %1131 = vmatprep.subr.mxu0 0.0
    %1132 = vmatpush1.msra.mxu0 0.0
    %1133 = vmatprep.subr.mxu0 0.0
    %1134 = vmatpush1.msra.mxu0 0.0
    %1135 = vmatprep.mubr.f32.mxu0 0.0
    %1136 = vmatmul.mubr.f32.gmra.mrb[0].mxu0 %v1065
    %v1137 = vpop.f32.mrb[0].mxu0
    %v1138 = vadd.f32 0.0, %v1137
    %v1139 = vpop.f32.mrb[0].mxu0
    %v1140 = vadd.f32 0.0, %v1139
    %1141 = vdwg.mxu0
    %1142 = vmatprep.subr.mxu0 0.0
    %1143 = vmatpush1.msra.mxu0 %v344
    %1144 = vmatprep.subr.mxu0 0.0
    %1145 = vmatpush1.msra.mxu0 %v347
    %1146 = vmatprep.subr.mxu0 0.0
    %1147 = vmatpush1.msra.mxu0 %v350
    %1148 = vmatprep.subr.mxu0 0.0
    %1149 = vmatpush1.msra.mxu0 %v353
    %1150 = vmatprep.subr.mxu0 0.0
    %1151 = vmatpush1.msra.mxu0 %v356
    %1152 = vmatprep.subr.mxu0 0.0
    %1153 = vmatpush1.msra.mxu0 %v359
    %1154 = vmatprep.subr.mxu0 0.0
    %1155 = vmatpush1.msra.mxu0 %v362
    %1156 = vmatprep.subr.mxu0 0.0
    %1157 = vmatpush1.msra.mxu0 %v365
    %1158 = vmatprep.subr.mxu0 0.0
    %1159 = vmatpush1.msra.mxu0 %v368
    %1160 = vmatprep.subr.mxu0 0.0
    %1161 = vmatpush1.msra.mxu0 %v371
    %1162 = vmatprep.subr.mxu0 0.0
    %1163 = vmatpush1.msra.mxu0 %v374
    %1164 = vmatprep.subr.mxu0 0.0
    %1165 = vmatpush1.msra.mxu0 %v377
    %1166 = vmatprep.subr.mxu0 0.0
    %1167 = vmatpush1.msra.mxu0 %v380
    %1168 = vmatprep.subr.mxu0 0.0
    %1169 = vmatpush1.msra.mxu0 %v383
    %1170 = vmatprep.subr.mxu0 0.0
    %1171 = vmatpush1.msra.mxu0 %v386
    %1172 = vmatprep.subr.mxu0 0.0
    %1173 = vmatpush1.msra.mxu0 %v389
    %1174 = vmatprep.subr.mxu0 0.0
    %1175 = vmatpush1.msra.mxu0 0.0
    %1176 = vmatprep.subr.mxu0 0.0
    %1177 = vmatpush1.msra.mxu0 0.0
    %1178 = vmatprep.subr.mxu0 0.0
    %1179 = vmatpush1.msra.mxu0 0.0
    %1180 = vmatprep.subr.mxu0 0.0
    %1181 = vmatpush1.msra.mxu0 0.0
    %1182 = vmatprep.subr.mxu0 0.0
    %1183 = vmatpush1.msra.mxu0 0.0
    %1184 = vmatprep.subr.mxu0 0.0
    %1185 = vmatpush1.msra.mxu0 0.0
    %1186 = vmatprep.subr.mxu0 0.0
    %1187 = vmatpush1.msra.mxu0 0.0
    %1188 = vmatprep.subr.mxu0 0.0
    %1189 = vmatpush1.msra.mxu0 0.0
    %1190 = vmatprep.subr.mxu0 0.0
    %1191 = vmatpush1.msra.mxu0 0.0
    %1192 = vmatprep.subr.mxu0 0.0
    %1193 = vmatpush1.msra.mxu0 0.0
    %1194 = vmatprep.subr.mxu0 0.0
    %1195 = vmatpush1.msra.mxu0 0.0
    %1196 = vmatprep.subr.mxu0 0.0
    %1197 = vmatpush1.msra.mxu0 0.0
    %1198 = vmatprep.subr.mxu0 0.0
    %1199 = vmatpush1.msra.mxu0 0.0
    %1200 = vmatprep.subr.mxu0 0.0
    %1201 = vmatpush1.msra.mxu0 0.0
    %1202 = vmatprep.subr.mxu0 0.0
    %1203 = vmatpush1.msra.mxu0 0.0
    %1204 = vmatprep.subr.mxu0 0.0
    %1205 = vmatpush1.msra.mxu0 0.0
    %1206 = vmatprep.mubr.f32.mxu0 0.0
    %1207 = vmatmul.mubr.f32.gmra.mrb[0].mxu0 %v1065
    %v1208 = vpop.f32.mrb[0].mxu0
    %v1209 = vadd.f32 0.0, %v1208
    %v1210 = vpop.f32.mrb[0].mxu0
    %1211 = vdwg.mxu0
    %v1212 = vadd.f32 %v1068, %v1138
    %v1213 = vxor.u32 %v1212, 2147483648
    %v1214 = vmul.f32 %v1213, 1.442695
    %v1215 = vpow.pop %v1214
    %v1216 = vadd.f32 %v1215, 1.0
    %v1217 = vrcp.pop %v1216
    %v1218 = vmul.f32 1.0, %v1217
    %v1219 = vadd.f32 %v1069, %v1140
    %v1220 = vxor.u32 %v1219, 2147483648
    %v1221 = vmul.f32 %v1220, 1.442695
    %v1222 = vpow.pop %v1221
    %v1223 = vadd.f32 %v1222, 1.0
    %v1224 = vrcp.pop %v1223
    %v1225 = vmul.f32 1.0, %v1224
    %v1226 = vadd.f32 %v1209, %v395
    %v1227 = vmul.f32 %v1218, %v1226
    %v1228 = vadd.f32 %v1070, %v1227
    %v1229 = vtanh.pop %v1228
    %v1230 = vsub.f32 1.0, %v1225
    %v1231 = vmul.f32 %v1230, %v1229
    %v1232 = vmul.f32 %v1225, %v1065
    %v1233 = vadd.f32 %v1231, %v1232
    %s1234 = scalar_lea.vmem [#allocation6], 32
    %1235 = vst [vmem:[%s1234] sm:$0xff] %v1233
    %v1236 = vld [vmem:[#allocation2 + $0x78] sm:$0xff]
    %v1237 = vld [vmem:[#allocation2 + $0x80] sm:$0xff]
    %v1238 = vld [vmem:[#allocation2 + $0x88] sm:$0xff]
    %1239 = vmatprep.subr.mxu0 %v343
    %1240 = vmatpush1.msra.mxu0 %v342
    %1241 = vmatprep.subr.mxu0 %v346
    %1242 = vmatpush1.msra.mxu0 %v345
    %1243 = vmatprep.subr.mxu0 %v349
    %1244 = vmatpush1.msra.mxu0 %v348
    %1245 = vmatprep.subr.mxu0 %v352
    %1246 = vmatpush1.msra.mxu0 %v351
    %1247 = vmatprep.subr.mxu0 %v355
    %1248 = vmatpush1.msra.mxu0 %v354
    %1249 = vmatprep.subr.mxu0 %v358
    %1250 = vmatpush1.msra.mxu0 %v357
    %1251 = vmatprep.subr.mxu0 %v361
    %1252 = vmatpush1.msra.mxu0 %v360
    %1253 = vmatprep.subr.mxu0 %v364
    %1254 = vmatpush1.msra.mxu0 %v363
    %1255 = vmatprep.subr.mxu0 %v367
    %1256 = vmatpush1.msra.mxu0 %v366
    %1257 = vmatprep.subr.mxu0 %v370
    %1258 = vmatpush1.msra.mxu0 %v369
    %1259 = vmatprep.subr.mxu0 %v373
    %1260 = vmatpush1.msra.mxu0 %v372
    %1261 = vmatprep.subr.mxu0 %v376
    %1262 = vmatpush1.msra.mxu0 %v375
    %1263 = vmatprep.subr.mxu0 %v379
    %1264 = vmatpush1.msra.mxu0 %v378
    %1265 = vmatprep.subr.mxu0 %v382
    %1266 = vmatpush1.msra.mxu0 %v381
    %1267 = vmatprep.subr.mxu0 %v385
    %1268 = vmatpush1.msra.mxu0 %v384
    %1269 = vmatprep.subr.mxu0 %v388
    %1270 = vmatpush1.msra.mxu0 %v387
    %1271 = vmatprep.subr.mxu0 0.0
    %1272 = vmatpush1.msra.mxu0 0.0
    %1273 = vmatprep.subr.mxu0 0.0
    %1274 = vmatpush1.msra.mxu0 0.0
    %1275 = vmatprep.subr.mxu0 0.0
    %1276 = vmatpush1.msra.mxu0 0.0
    %1277 = vmatprep.subr.mxu0 0.0
    %1278 = vmatpush1.msra.mxu0 0.0
    %1279 = vmatprep.subr.mxu0 0.0
    %1280 = vmatpush1.msra.mxu0 0.0
    %1281 = vmatprep.subr.mxu0 0.0
    %1282 = vmatpush1.msra.mxu0 0.0
    %1283 = vmatprep.subr.mxu0 0.0
    %1284 = vmatpush1.msra.mxu0 0.0
    %1285 = vmatprep.subr.mxu0 0.0
    %1286 = vmatpush1.msra.mxu0 0.0
    %1287 = vmatprep.subr.mxu0 0.0
    %1288 = vmatpush1.msra.mxu0 0.0
    %1289 = vmatprep.subr.mxu0 0.0
    %1290 = vmatpush1.msra.mxu0 0.0
    %1291 = vmatprep.subr.mxu0 0.0
    %1292 = vmatpush1.msra.mxu0 0.0
    %1293 = vmatprep.subr.mxu0 0.0
    %1294 = vmatpush1.msra.mxu0 0.0
    %1295 = vmatprep.subr.mxu0 0.0
    %1296 = vmatpush1.msra.mxu0 0.0
    %1297 = vmatprep.subr.mxu0 0.0
    %1298 = vmatpush1.msra.mxu0 0.0
    %1299 = vmatprep.subr.mxu0 0.0
    %1300 = vmatpush1.msra.mxu0 0.0
    %1301 = vmatprep.subr.mxu0 0.0
    %1302 = vmatpush1.msra.mxu0 0.0
    %1303 = vmatprep.mubr.f32.mxu0 0.0
    %1304 = vmatmul.mubr.f32.gmra.mrb[0].mxu0 %v1233
    %v1305 = vpop.f32.mrb[0].mxu0
    %v1306 = vadd.f32 0.0, %v1305
    %v1307 = vpop.f32.mrb[0].mxu0
    %v1308 = vadd.f32 0.0, %v1307
    %1309 = vdwg.mxu0
    %1310 = vmatprep.subr.mxu0 0.0
    %1311 = vmatpush1.msra.mxu0 %v344
    %1312 = vmatprep.subr.mxu0 0.0
    %1313 = vmatpush1.msra.mxu0 %v347
    %1314 = vmatprep.subr.mxu0 0.0
    %1315 = vmatpush1.msra.mxu0 %v350
    %1316 = vmatprep.subr.mxu0 0.0
    %1317 = vmatpush1.msra.mxu0 %v353
    %1318 = vmatprep.subr.mxu0 0.0
    %1319 = vmatpush1.msra.mxu0 %v356
    %1320 = vmatprep.subr.mxu0 0.0
    %1321 = vmatpush1.msra.mxu0 %v359
    %1322 = vmatprep.subr.mxu0 0.0
    %1323 = vmatpush1.msra.mxu0 %v362
    %1324 = vmatprep.subr.mxu0 0.0
    %1325 = vmatpush1.msra.mxu0 %v365
    %1326 = vmatprep.subr.mxu0 0.0
    %1327 = vmatpush1.msra.mxu0 %v368
    %1328 = vmatprep.subr.mxu0 0.0
    %1329 = vmatpush1.msra.mxu0 %v371
    %1330 = vmatprep.subr.mxu0 0.0
    %1331 = vmatpush1.msra.mxu0 %v374
    %1332 = vmatprep.subr.mxu0 0.0
    %1333 = vmatpush1.msra.mxu0 %v377
    %1334 = vmatprep.subr.mxu0 0.0
    %1335 = vmatpush1.msra.mxu0 %v380
    %1336 = vmatprep.subr.mxu0 0.0
    %1337 = vmatpush1.msra.mxu0 %v383
    %1338 = vmatprep.subr.mxu0 0.0
    %1339 = vmatpush1.msra.mxu0 %v386
    %1340 = vmatprep.subr.mxu0 0.0
    %1341 = vmatpush1.msra.mxu0 %v389
    %1342 = vmatprep.subr.mxu0 0.0
    %1343 = vmatpush1.msra.mxu0 0.0
    %1344 = vmatprep.subr.mxu0 0.0
    %1345 = vmatpush1.msra.mxu0 0.0
    %1346 = vmatprep.subr.mxu0 0.0
    %1347 = vmatpush1.msra.mxu0 0.0
    %1348 = vmatprep.subr.mxu0 0.0
    %1349 = vmatpush1.msra.mxu0 0.0
    %1350 = vmatprep.subr.mxu0 0.0
    %1351 = vmatpush1.msra.mxu0 0.0
    %1352 = vmatprep.subr.mxu0 0.0
    %1353 = vmatpush1.msra.mxu0 0.0
    %1354 = vmatprep.subr.mxu0 0.0
    %1355 = vmatpush1.msra.mxu0 0.0
    %1356 = vmatprep.subr.mxu0 0.0
    %1357 = vmatpush1.msra.mxu0 0.0
    %1358 = vmatprep.subr.mxu0 0.0
    %1359 = vmatpush1.msra.mxu0 0.0
    %1360 = vmatprep.subr.mxu0 0.0
    %1361 = vmatpush1.msra.mxu0 0.0
    %1362 = vmatprep.subr.mxu0 0.0
    %1363 = vmatpush1.msra.mxu0 0.0
    %1364 = vmatprep.subr.mxu0 0.0
    %1365 = vmatpush1.msra.mxu0 0.0
    %1366 = vmatprep.subr.mxu0 0.0
    %1367 = vmatpush1.msra.mxu0 0.0
    %1368 = vmatprep.subr.mxu0 0.0
    %1369 = vmatpush1.msra.mxu0 0.0
    %1370 = vmatprep.subr.mxu0 0.0
    %1371 = vmatpush1.msra.mxu0 0.0
    %1372 = vmatprep.subr.mxu0 0.0
    %1373 = vmatpush1.msra.mxu0 0.0
    %1374 = vmatprep.mubr.f32.mxu0 0.0
    %1375 = vmatmul.mubr.f32.gmra.mrb[0].mxu0 %v1233
    %v1376 = vpop.f32.mrb[0].mxu0
    %v1377 = vadd.f32 0.0, %v1376
    %v1378 = vpop.f32.mrb[0].mxu0
    %1379 = vdwg.mxu0
    %v1380 = vadd.f32 %v1236, %v1306
    %v1381 = vxor.u32 %v1380, 2147483648
    %v1382 = vmul.f32 %v1381, 1.442695
    %v1383 = vpow.pop %v1382
    %v1384 = vadd.f32 %v1383, 1.0
    %v1385 = vrcp.pop %v1384
    %v1386 = vmul.f32 1.0, %v1385
    %v1387 = vadd.f32 %v1237, %v1308
    %v1388 = vxor.u32 %v1387, 2147483648
    %v1389 = vmul.f32 %v1388, 1.442695
    %v1390 = vpow.pop %v1389
    %v1391 = vadd.f32 %v1390, 1.0
    %v1392 = vrcp.pop %v1391
    %v1393 = vmul.f32 1.0, %v1392
    %v1394 = vadd.f32 %v1377, %v395
    %v1395 = vmul.f32 %v1386, %v1394
    %v1396 = vadd.f32 %v1238, %v1395
    %v1397 = vtanh.pop %v1396
    %v1398 = vsub.f32 1.0, %v1393
    %v1399 = vmul.f32 %v1398, %v1397
    %v1400 = vmul.f32 %v1393, %v1233
    %v1401 = vadd.f32 %v1399, %v1400
    %s1402 = scalar_lea.vmem [#allocation6], 40
    %1403 = vst [vmem:[%s1402] sm:$0xff] %v1401
    %v1404 = vld [vmem:[#allocation2 + $0x90] sm:$0xff]
    %v1405 = vld [vmem:[#allocation2 + $0x98] sm:$0xff]
    %v1406 = vld [vmem:[#allocation2 + $0xa0] sm:$0xff]
    %1407 = vmatprep.subr.mxu0 %v343
    %1408 = vmatpush1.msra.mxu0 %v342
    %1409 = vmatprep.subr.mxu0 %v346
    %1410 = vmatpush1.msra.mxu0 %v345
    %1411 = vmatprep.subr.mxu0 %v349
    %1412 = vmatpush1.msra.mxu0 %v348
    %1413 = vmatprep.subr.mxu0 %v352
    %1414 = vmatpush1.msra.mxu0 %v351
    %1415 = vmatprep.subr.mxu0 %v355
    %1416 = vmatpush1.msra.mxu0 %v354
    %1417 = vmatprep.subr.mxu0 %v358
    %1418 = vmatpush1.msra.mxu0 %v357
    %1419 = vmatprep.subr.mxu0 %v361
    %1420 = vmatpush1.msra.mxu0 %v360
    %1421 = vmatprep.subr.mxu0 %v364
    %1422 = vmatpush1.msra.mxu0 %v363
    %1423 = vmatprep.subr.mxu0 %v367
    %1424 = vmatpush1.msra.mxu0 %v366
    %1425 = vmatprep.subr.mxu0 %v370
    %1426 = vmatpush1.msra.mxu0 %v369
    %1427 = vmatprep.subr.mxu0 %v373
    %1428 = vmatpush1.msra.mxu0 %v372
    %1429 = vmatprep.subr.mxu0 %v376
    %1430 = vmatpush1.msra.mxu0 %v375
    %1431 = vmatprep.subr.mxu0 %v379
    %1432 = vmatpush1.msra.mxu0 %v378
    %1433 = vmatprep.subr.mxu0 %v382
    %1434 = vmatpush1.msra.mxu0 %v381
    %1435 = vmatprep.subr.mxu0 %v385
    %1436 = vmatpush1.msra.mxu0 %v384
    %1437 = vmatprep.subr.mxu0 %v388
    %1438 = vmatpush1.msra.mxu0 %v387
    %1439 = vmatprep.subr.mxu0 0.0
    %1440 = vmatpush1.msra.mxu0 0.0
    %1441 = vmatprep.subr.mxu0 0.0
    %1442 = vmatpush1.msra.mxu0 0.0
    %1443 = vmatprep.subr.mxu0 0.0
    %1444 = vmatpush1.msra.mxu0 0.0
    %1445 = vmatprep.subr.mxu0 0.0
    %1446 = vmatpush1.msra.mxu0 0.0
    %1447 = vmatprep.subr.mxu0 0.0
    %1448 = vmatpush1.msra.mxu0 0.0
    %1449 = vmatprep.subr.mxu0 0.0
    %1450 = vmatpush1.msra.mxu0 0.0
    %1451 = vmatprep.subr.mxu0 0.0
    %1452 = vmatpush1.msra.mxu0 0.0
    %1453 = vmatprep.subr.mxu0 0.0
    %1454 = vmatpush1.msra.mxu0 0.0
    %1455 = vmatprep.subr.mxu0 0.0
    %1456 = vmatpush1.msra.mxu0 0.0
    %1457 = vmatprep.subr.mxu0 0.0
    %1458 = vmatpush1.msra.mxu0 0.0
    %1459 = vmatprep.subr.mxu0 0.0
    %1460 = vmatpush1.msra.mxu0 0.0
    %1461 = vmatprep.subr.mxu0 0.0
    %1462 = vmatpush1.msra.mxu0 0.0
    %1463 = vmatprep.subr.mxu0 0.0
    %1464 = vmatpush1.msra.mxu0 0.0
    %1465 = vmatprep.subr.mxu0 0.0
    %1466 = vmatpush1.msra.mxu0 0.0
    %1467 = vmatprep.subr.mxu0 0.0
    %1468 = vmatpush1.msra.mxu0 0.0
    %1469 = vmatprep.subr.mxu0 0.0
    %1470 = vmatpush1.msra.mxu0 0.0
    %1471 = vmatprep.mubr.f32.mxu0 0.0
    %1472 = vmatmul.mubr.f32.gmra.mrb[0].mxu0 %v1401
    %v1473 = vpop.f32.mrb[0].mxu0
    %v1474 = vadd.f32 0.0, %v1473
    %v1475 = vpop.f32.mrb[0].mxu0
    %v1476 = vadd.f32 0.0, %v1475
    %1477 = vdwg.mxu0
    %1478 = vmatprep.subr.mxu0 0.0
    %1479 = vmatpush1.msra.mxu0 %v344
    %1480 = vmatprep.subr.mxu0 0.0
    %1481 = vmatpush1.msra.mxu0 %v347
    %1482 = vmatprep.subr.mxu0 0.0
    %1483 = vmatpush1.msra.mxu0 %v350
    %1484 = vmatprep.subr.mxu0 0.0
    %1485 = vmatpush1.msra.mxu0 %v353
    %1486 = vmatprep.subr.mxu0 0.0
    %1487 = vmatpush1.msra.mxu0 %v356
    %1488 = vmatprep.subr.mxu0 0.0
    %1489 = vmatpush1.msra.mxu0 %v359
    %1490 = vmatprep.subr.mxu0 0.0
    %1491 = vmatpush1.msra.mxu0 %v362
    %1492 = vmatprep.subr.mxu0 0.0
    %1493 = vmatpush1.msra.mxu0 %v365
    %1494 = vmatprep.subr.mxu0 0.0
    %1495 = vmatpush1.msra.mxu0 %v368
    %1496 = vmatprep.subr.mxu0 0.0
    %1497 = vmatpush1.msra.mxu0 %v371
    %1498 = vmatprep.subr.mxu0 0.0
    %1499 = vmatpush1.msra.mxu0 %v374
    %1500 = vmatprep.subr.mxu0 0.0
    %1501 = vmatpush1.msra.mxu0 %v377
    %1502 = vmatprep.subr.mxu0 0.0
    %1503 = vmatpush1.msra.mxu0 %v380
    %1504 = vmatprep.subr.mxu0 0.0
    %1505 = vmatpush1.msra.mxu0 %v383
    %1506 = vmatprep.subr.mxu0 0.0
    %1507 = vmatpush1.msra.mxu0 %v386
    %1508 = vmatprep.subr.mxu0 0.0
    %1509 = vmatpush1.msra.mxu0 %v389
    %1510 = vmatprep.subr.mxu0 0.0
    %1511 = vmatpush1.msra.mxu0 0.0
    %1512 = vmatprep.subr.mxu0 0.0
    %1513 = vmatpush1.msra.mxu0 0.0
    %1514 = vmatprep.subr.mxu0 0.0
    %1515 = vmatpush1.msra.mxu0 0.0
    %1516 = vmatprep.subr.mxu0 0.0
    %1517 = vmatpush1.msra.mxu0 0.0
    %1518 = vmatprep.subr.mxu0 0.0
    %1519 = vmatpush1.msra.mxu0 0.0
    %1520 = vmatprep.subr.mxu0 0.0
    %1521 = vmatpush1.msra.mxu0 0.0
    %1522 = vmatprep.subr.mxu0 0.0
    %1523 = vmatpush1.msra.mxu0 0.0
    %1524 = vmatprep.subr.mxu0 0.0
    %1525 = vmatpush1.msra.mxu0 0.0
    %1526 = vmatprep.subr.mxu0 0.0
    %1527 = vmatpush1.msra.mxu0 0.0
    %1528 = vmatprep.subr.mxu0 0.0
    %1529 = vmatpush1.msra.mxu0 0.0
    %1530 = vmatprep.subr.mxu0 0.0
    %1531 = vmatpush1.msra.mxu0 0.0
    %1532 = vmatprep.subr.mxu0 0.0
    %1533 = vmatpush1.msra.mxu0 0.0
    %1534 = vmatprep.subr.mxu0 0.0
    %1535 = vmatpush1.msra.mxu0 0.0
    %1536 = vmatprep.subr.mxu0 0.0
    %1537 = vmatpush1.msra.mxu0 0.0
    %1538 = vmatprep.subr.mxu0 0.0
    %1539 = vmatpush1.msra.mxu0 0.0
    %1540 = vmatprep.subr.mxu0 0.0
    %1541 = vmatpush1.msra.mxu0 0.0
    %1542 = vmatprep.mubr.f32.mxu0 0.0
    %1543 = vmatmul.mubr.f32.gmra.mrb[0].mxu0 %v1401
    %v1544 = vpop.f32.mrb[0].mxu0
    %v1545 = vadd.f32 0.0, %v1544
    %v1546 = vpop.f32.mrb[0].mxu0
    %1547 = vdwg.mxu0
    %v1548 = vadd.f32 %v1404, %v1474
    %v1549 = vxor.u32 %v1548, 2147483648
    %v1550 = vmul.f32 %v1549, 1.442695
    %v1551 = vpow.pop %v1550
    %v1552 = vadd.f32 %v1551, 1.0
    %v1553 = vrcp.pop %v1552
    %v1554 = vmul.f32 1.0, %v1553
    %v1555 = vadd.f32 %v1405, %v1476
    %v1556 = vxor.u32 %v1555, 2147483648
    %v1557 = vmul.f32 %v1556, 1.442695
    %v1558 = vpow.pop %v1557
    %v1559 = vadd.f32 %v1558, 1.0
    %v1560 = vrcp.pop %v1559
    %v1561 = vmul.f32 1.0, %v1560
    %v1562 = vadd.f32 %v1545, %v395
    %v1563 = vmul.f32 %v1554, %v1562
    %v1564 = vadd.f32 %v1406, %v1563
    %v1565 = vtanh.pop %v1564
    %v1566 = vsub.f32 1.0, %v1561
    %v1567 = vmul.f32 %v1566, %v1565
    %v1568 = vmul.f32 %v1561, %v1401
    %v1569 = vadd.f32 %v1567, %v1568
    %s1570 = scalar_lea.vmem [#allocation6], 48
    %1571 = vst [vmem:[%s1570] sm:$0xff] %v1569
    %v1572 = vld [vmem:[#allocation2 + $0xa8] sm:$0xff]
    %v1573 = vld [vmem:[#allocation2 + $0xb0] sm:$0xff]
    %v1574 = vld [vmem:[#allocation2 + $0xb8] sm:$0xff]
    %1575 = vmatprep.subr.mxu0 %v343
    %1576 = vmatpush1.msra.mxu0 %v342
    %1577 = vmatprep.subr.mxu0 %v346
    %1578 = vmatpush1.msra.mxu0 %v345
    %1579 = vmatprep.subr.mxu0 %v349
    %1580 = vmatpush1.msra.mxu0 %v348
    %1581 = vmatprep.subr.mxu0 %v352
    %1582 = vmatpush1.msra.mxu0 %v351
    %1583 = vmatprep.subr.mxu0 %v355
    %1584 = vmatpush1.msra.mxu0 %v354
    %1585 = vmatprep.subr.mxu0 %v358
    %1586 = vmatpush1.msra.mxu0 %v357
    %1587 = vmatprep.subr.mxu0 %v361
    %1588 = vmatpush1.msra.mxu0 %v360
    %1589 = vmatprep.subr.mxu0 %v364
    %1590 = vmatpush1.msra.mxu0 %v363
    %1591 = vmatprep.subr.mxu0 %v367
    %1592 = vmatpush1.msra.mxu0 %v366
    %1593 = vmatprep.subr.mxu0 %v370
    %1594 = vmatpush1.msra.mxu0 %v369
    %1595 = vmatprep.subr.mxu0 %v373
    %1596 = vmatpush1.msra.mxu0 %v372
    %1597 = vmatprep.subr.mxu0 %v376
    %1598 = vmatpush1.msra.mxu0 %v375
    %1599 = vmatprep.subr.mxu0 %v379
    %1600 = vmatpush1.msra.mxu0 %v378
    %1601 = vmatprep.subr.mxu0 %v382
    %1602 = vmatpush1.msra.mxu0 %v381
    %1603 = vmatprep.subr.mxu0 %v385
    %1604 = vmatpush1.msra.mxu0 %v384
    %1605 = vmatprep.subr.mxu0 %v388
    %1606 = vmatpush1.msra.mxu0 %v387
    %1607 = vmatprep.subr.mxu0 0.0
    %1608 = vmatpush1.msra.mxu0 0.0
    %1609 = vmatprep.subr.mxu0 0.0
    %1610 = vmatpush1.msra.mxu0 0.0
    %1611 = vmatprep.subr.mxu0 0.0
    %1612 = vmatpush1.msra.mxu0 0.0
    %1613 = vmatprep.subr.mxu0 0.0
    %1614 = vmatpush1.msra.mxu0 0.0
    %1615 = vmatprep.subr.mxu0 0.0
    %1616 = vmatpush1.msra.mxu0 0.0
    %1617 = vmatprep.subr.mxu0 0.0
    %1618 = vmatpush1.msra.mxu0 0.0
    %1619 = vmatprep.subr.mxu0 0.0
    %1620 = vmatpush1.msra.mxu0 0.0
    %1621 = vmatprep.subr.mxu0 0.0
    %1622 = vmatpush1.msra.mxu0 0.0
    %1623 = vmatprep.subr.mxu0 0.0
    %1624 = vmatpush1.msra.mxu0 0.0
    %1625 = vmatprep.subr.mxu0 0.0
    %1626 = vmatpush1.msra.mxu0 0.0
    %1627 = vmatprep.subr.mxu0 0.0
    %1628 = vmatpush1.msra.mxu0 0.0
    %1629 = vmatprep.subr.mxu0 0.0
    %1630 = vmatpush1.msra.mxu0 0.0
    %1631 = vmatprep.subr.mxu0 0.0
    %1632 = vmatpush1.msra.mxu0 0.0
    %1633 = vmatprep.subr.mxu0 0.0
    %1634 = vmatpush1.msra.mxu0 0.0
    %1635 = vmatprep.subr.mxu0 0.0
    %1636 = vmatpush1.msra.mxu0 0.0
    %1637 = vmatprep.subr.mxu0 0.0
    %1638 = vmatpush1.msra.mxu0 0.0
    %1639 = vmatprep.mubr.f32.mxu0 0.0
    %1640 = vmatmul.mubr.f32.gmra.mrb[0].mxu0 %v1569
    %v1641 = vpop.f32.mrb[0].mxu0
    %v1642 = vadd.f32 0.0, %v1641
    %v1643 = vpop.f32.mrb[0].mxu0
    %v1644 = vadd.f32 0.0, %v1643
    %1645 = vdwg.mxu0
    %1646 = vmatprep.subr.mxu0 0.0
    %1647 = vmatpush1.msra.mxu0 %v344
    %1648 = vmatprep.subr.mxu0 0.0
    %1649 = vmatpush1.msra.mxu0 %v347
    %1650 = vmatprep.subr.mxu0 0.0
    %1651 = vmatpush1.msra.mxu0 %v350
    %1652 = vmatprep.subr.mxu0 0.0
    %1653 = vmatpush1.msra.mxu0 %v353
    %1654 = vmatprep.subr.mxu0 0.0
    %1655 = vmatpush1.msra.mxu0 %v356
    %1656 = vmatprep.subr.mxu0 0.0
    %1657 = vmatpush1.msra.mxu0 %v359
    %1658 = vmatprep.subr.mxu0 0.0
    %1659 = vmatpush1.msra.mxu0 %v362
    %1660 = vmatprep.subr.mxu0 0.0
    %1661 = vmatpush1.msra.mxu0 %v365
    %1662 = vmatprep.subr.mxu0 0.0
    %1663 = vmatpush1.msra.mxu0 %v368
    %1664 = vmatprep.subr.mxu0 0.0
    %1665 = vmatpush1.msra.mxu0 %v371
    %1666 = vmatprep.subr.mxu0 0.0
    %1667 = vmatpush1.msra.mxu0 %v374
    %1668 = vmatprep.subr.mxu0 0.0
    %1669 = vmatpush1.msra.mxu0 %v377
    %1670 = vmatprep.subr.mxu0 0.0
    %1671 = vmatpush1.msra.mxu0 %v380
    %1672 = vmatprep.subr.mxu0 0.0
    %1673 = vmatpush1.msra.mxu0 %v383
    %1674 = vmatprep.subr.mxu0 0.0
    %1675 = vmatpush1.msra.mxu0 %v386
    %1676 = vmatprep.subr.mxu0 0.0
    %1677 = vmatpush1.msra.mxu0 %v389
    %1678 = vmatprep.subr.mxu0 0.0
    %1679 = vmatpush1.msra.mxu0 0.0
    %1680 = vmatprep.subr.mxu0 0.0
    %1681 = vmatpush1.msra.mxu0 0.0
    %1682 = vmatprep.subr.mxu0 0.0
    %1683 = vmatpush1.msra.mxu0 0.0
    %1684 = vmatprep.subr.mxu0 0.0
    %1685 = vmatpush1.msra.mxu0 0.0
    %1686 = vmatprep.subr.mxu0 0.0
    %1687 = vmatpush1.msra.mxu0 0.0
    %1688 = vmatprep.subr.mxu0 0.0
    %1689 = vmatpush1.msra.mxu0 0.0
    %1690 = vmatprep.subr.mxu0 0.0
    %1691 = vmatpush1.msra.mxu0 0.0
    %1692 = vmatprep.subr.mxu0 0.0
    %1693 = vmatpush1.msra.mxu0 0.0
    %1694 = vmatprep.subr.mxu0 0.0
    %1695 = vmatpush1.msra.mxu0 0.0
    %1696 = vmatprep.subr.mxu0 0.0
    %1697 = vmatpush1.msra.mxu0 0.0
    %1698 = vmatprep.subr.mxu0 0.0
    %1699 = vmatpush1.msra.mxu0 0.0
    %1700 = vmatprep.subr.mxu0 0.0
    %1701 = vmatpush1.msra.mxu0 0.0
    %1702 = vmatprep.subr.mxu0 0.0
    %1703 = vmatpush1.msra.mxu0 0.0
    %1704 = vmatprep.subr.mxu0 0.0
    %1705 = vmatpush1.msra.mxu0 0.0
    %1706 = vmatprep.subr.mxu0 0.0
    %1707 = vmatpush1.msra.mxu0 0.0
    %1708 = vmatprep.subr.mxu0 0.0
    %1709 = vmatpush1.msra.mxu0 0.0
    %1710 = vmatprep.mubr.f32.mxu0 0.0
    %1711 = vmatmul.mubr.f32.gmra.mrb[0].mxu0 %v1569
    %v1712 = vpop.f32.mrb[0].mxu0
    %v1713 = vadd.f32 0.0, %v1712
    %v1714 = vpop.f32.mrb[0].mxu0
    %1715 = vdwg.mxu0
    %v1716 = vadd.f32 %v1572, %v1642
    %v1717 = vxor.u32 %v1716, 2147483648
    %v1718 = vmul.f32 %v1717, 1.442695
    %v1719 = vpow.pop %v1718
    %v1720 = vadd.f32 %v1719, 1.0
    %v1721 = vrcp.pop %v1720
    %v1722 = vmul.f32 1.0, %v1721
    %v1723 = vadd.f32 %v1573, %v1644
    %v1724 = vxor.u32 %v1723, 2147483648
    %v1725 = vmul.f32 %v1724, 1.442695
    %v1726 = vpow.pop %v1725
    %v1727 = vadd.f32 %v1726, 1.0
    %v1728 = vrcp.pop %v1727
    %v1729 = vmul.f32 1.0, %v1728
    %v1730 = vadd.f32 %v1713, %v395
    %v1731 = vmul.f32 %v1722, %v1730
    %v1732 = vadd.f32 %v1574, %v1731
    %v1733 = vtanh.pop %v1732
    %v1734 = vsub.f32 1.0, %v1729
    %v1735 = vmul.f32 %v1734, %v1733
    %v1736 = vmul.f32 %v1729, %v1569
    %v1737 = vadd.f32 %v1735, %v1736
    %s1738 = scalar_lea.vmem [#allocation6], 56
    %1739 = vst [vmem:[%s1738] sm:$0xff] %v1737
    %1740 = vst [vmem:[#allocation7] sm:$0xff] %v1737
    // Predicated region
    $region26: #{tpu_custom_call.1} parent=1 // pred_check
      _
    $region27: #{tpu_custom_call.1} parent=1 // pred_check_branch
      %1742 = sbr.rel (0) target = $region29
    $region28: #{tpu_custom_call.1} parent=1 // pred_region
      %s1744 = ssub.s32 1024, 1024
      %1745 = vsyncadd [#allocation5], %s1744
      %s1746 = sshll.u32 [#allocation6], 4
      %s1747 = int_to_ptr.vmem [resolvable:$true] %s1746
      %1752 = dma.vmem_to_hbm [thread:$0]  %s1747, 1024, %s5, [#allocation5], 128, 128, 8
    $region29: #{tpu_custom_call.1} parent=1 // pred_fallthru
      _
    // Predicated region
    $region30: #{tpu_custom_call.1} parent=1 // pred_check
      _
    $region31: #{tpu_custom_call.1} parent=1 // pred_check_branch
      %1754 = sbr.rel (0) target = $region33
    $region32: #{tpu_custom_call.1} parent=1 // pred_region
      %s1756 = ssub.s32 128, 128
      %1757 = vsyncadd [#allocation8], %s1756
      %s1759 = sshll.u32 [#allocation7], 4
      %s1760 = int_to_ptr.vmem [resolvable:$true] %s1759
      %1762 = dma.vmem_to_hbm [thread:$0]  %s1760, 128, %s6, [#allocation8]
    $region33: #{tpu_custom_call.1} parent=1 // pred_fallthru
      _
    // Predicated region
    $region34: #{tpu_custom_call.1} parent=1 // pred_check
      _
    $region35: #{tpu_custom_call.1} parent=1 // pred_check_branch
      %1764 = sbr.rel (0) target = $region37
    $region36: #{tpu_custom_call.1} parent=1 // pred_region
      %1765 = dma.done [#allocation5], 1024
    $region37: #{tpu_custom_call.1} parent=1 // pred_fallthru
      _
    // Predicated region
    $region38: #{tpu_custom_call.1} parent=1 // pred_check
      _
    $region39: #{tpu_custom_call.1} parent=1 // pred_check_branch
      %1767 = sbr.rel (0) target = $region41
    $region40: #{tpu_custom_call.1} parent=1 // pred_region
      %1768 = dma.done [#allocation8], 128
    $region41: #{tpu_custom_call.1} parent=1 // pred_fallthru
      _
    %1769 = vsyncpa [#allocation4], 1
    %1770 = vsyncpa [#allocation5], 1
    %1771 = vsyncpa [#allocation8], 1

</llo_original>
